<compile_context>
chip_gen: v5e
topology: v5e:2x2
jax: 0.10.0
libtpu: 0.0.40
codegen_flags: <defaults>
</compile_context>

<pallas_src>
import functools

import jax
import jax.numpy as jnp
from jax.experimental import pallas as pl
from jax.experimental.pallas import tpu as pltpu

# ----------------------------- config ---------------------------------------
B = 2            # batch
C = 3            # channels (ViT expects RGB)
IMG = 16         # image H = W
PATCH = 8        # patch size
NP = (IMG // PATCH) ** 2          # number of patches = 4
S = NP + 1                        # sequence length incl. class token = 5
S_PAD = 8                         # padded to the f32 sublane tile
D = 32           # hidden dim
NH = 4           # attention heads
DH = D // NH     # head dim = 8
MLP = 64         # mlp dim
LAYERS = 2       # encoder layers
OUT = 64         # head output features (nn.Linear(D, OUT, bias=False))
EPS = 1e-6       # torchvision ViT LayerNorm eps
CPP = C * PATCH * PATCH           # flattened patch length = 192

_INV_SQRT2 = 0.7071067811865476
_NEG_INF = -1e30

# --------------------------- slab layouts (static) ---------------------------
LANES = 128
# weight slab (bf16): each weight stored transposed (K, N), padded to 128 lanes
W_CONV = 0                                    # (CPP, D)
W_LAYER0 = CPP
WO_QKV, WO_OUT, WO_FC1, WO_FC2 = 0, D, 2 * D, 3 * D
W_PER_LAYER = 3 * D + MLP                     # 160 rows per layer
W_HEAD = W_LAYER0 + LAYERS * W_PER_LAYER      # (D, OUT)
W_ROWS = W_HEAD + D                           # 544 rows total
# vector slab (f32): [addend (B*S_PAD rows)] [8 rows per layer] [lnf_g, lnf_b, mask]
V_PER_LAYER = 8


# --------------------------- in-kernel helpers -------------------------------
def _mm(x, w):
    """MXU matmul: bf16 inputs, f32 accumulation (weights already bf16)."""
    return jnp.dot(x.astype(jnp.bfloat16), w, preferred_element_type=jnp.float32)


def _layernorm(x, g, b):
    """f32 LayerNorm over the last axis (biased variance, eps=1e-6)."""
    mu = jnp.mean(x, axis=-1, keepdims=True)
    xc = x - mu
    var = jnp.mean(xc * xc, axis=-1, keepdims=True)
    return xc * jax.lax.rsqrt(var + EPS) * g + b


# --------------------------- fused Pallas kernel ------------------------------
def _vit_fused_kernel(patches_ref, w_ref, v_ref, out_ref, *, batch):
    bs = batch * S_PAD
    v_layer0 = bs
    v_lnf = v_layer0 + LAYERS * V_PER_LAYER
    v_mask = v_lnf + 2

    def wblk(row, nrows, ncols):               # static slice of the bf16 weight slab
        return w_ref[row:row + nrows, 0:ncols]

    def vrow(row, ncols):                      # static (1, ncols) slice of the f32 slab
        return v_ref[row:row + 1, 0:ncols]

    # --- patch embedding fused with [cls ; tokens]+pos assembly: one matmul + add ---
    h = jnp.dot(patches_ref[...], wblk(W_CONV, CPP, D),
                preferred_element_type=jnp.float32) + v_ref[0:bs, 0:D]   # (bs, D) f32

    kmask = vrow(v_mask, S_PAD)                # (1, S_PAD): 0 for real keys, -1e30 pads

    # --- encoder layers (Python-unrolled, everything VMEM/vreg-resident) ---
    for l in range(LAYERS):
        wb = W_LAYER0 + l * W_PER_LAYER
        vb = v_layer0 + l * V_PER_LAYER

        # ---- self-attention sub-block ----
        y = _layernorm(h, vrow(vb + 0, D), vrow(vb + 1, D))
        qkv = _mm(y, wblk(wb + WO_QKV, D, 3 * D)) + vrow(vb + 2, 3 * D)  # Q pre-scaled
        q = qkv[:, 0:D].reshape(batch, S_PAD, D)
        k = qkv[:, D:2 * D].reshape(batch, S_PAD, D)
        v = qkv[:, 2 * D:3 * D].reshape(batch, S_PAD, D)
        # gather all heads into the leading (batch) dim -> (batch*NH, S_PAD, DH), bf16
        qh = jnp.concatenate([q[:, :, i * DH:(i + 1) * DH] for i in range(NH)],
                             axis=0).astype(jnp.bfloat16)
        kh = jnp.concatenate([k[:, :, i * DH:(i + 1) * DH] for i in range(NH)],
                             axis=0).astype(jnp.bfloat16)
        vh = jnp.concatenate([v[:, :, i * DH:(i + 1) * DH] for i in range(NH)],
                             axis=0).astype(jnp.bfloat16)
        s = jnp.einsum('bqd,bkd->bqk', qh, kh, preferred_element_type=jnp.float32)
        s = s + kmask                                         # mask the pad key columns
        s = s - jnp.max(s, axis=-1, keepdims=True)
        p = jnp.exp(s)
        p = p * pl.reciprocal(jnp.sum(p, axis=-1, keepdims=True), approx=True)
        ctx = jnp.einsum('bqk,bkd->bqd', p.astype(jnp.bfloat16), vh,
                         preferred_element_type=jnp.float32)  # (batch*NH, S_PAD, DH)
        ctx = jnp.concatenate([ctx[i * batch:(i + 1) * batch] for i in range(NH)],
                              axis=-1).reshape(bs, D)
        h = _mm(ctx, wblk(wb + WO_OUT, D, D)) + vrow(vb + 3, D) + h

        # ---- MLP sub-block ----
        z = _layernorm(h, vrow(vb + 4, D), vrow(vb + 5, D))
        m = _mm(z, wblk(wb + WO_FC1, D, MLP)) + vrow(vb + 6, MLP)
        m = 0.5 * m * (1.0 + jax.lax.erf(m * _INV_SQRT2))     # exact (erf) GELU, f32
        h = _mm(m, wblk(wb + WO_FC2, MLP, D)) + vrow(vb + 7, D) + h

    # --- CLS rows first (per-token LN => identical result, S_PAD x less LN work) ---
    cls = jnp.concatenate([h[i * S_PAD:i * S_PAD + 1, :] for i in range(batch)], axis=0)
    feat = _layernorm(cls, vrow(v_lnf, D), vrow(v_lnf + 1, D))            # (batch, D)

    # --- ViTAgeRecognizer head: Linear(D, OUT, bias=False) ---
    out_ref[...] = _mm(feat, wblk(W_HEAD, D, OUT))                        # (batch, OUT)


# ------------------------- parameters (synthetic) ----------------------------
# TODO(synk): pretrained torchvision weight loading (weights='DEFAULT') has no
# in-script equivalent; parameters are synthetic deterministic initializations.
def init_params(key):
    ks = iter(jax.random.split(key, 64))
    p = {
        # conv_proj: Conv2d(C, D, kernel=stride=PATCH) -> flattened (D, C*P*P)
        'conv_w': 0.02 * jax.random.normal(next(ks), (D, CPP), jnp.float32),
        'conv_b': 0.02 * jax.random.normal(next(ks), (D,), jnp.float32),
        'cls': jnp.zeros((1, 1, D), jnp.float32),                       # class_token
        'pos': 0.02 * jax.random.normal(next(ks), (1, S, D), jnp.float32),
        'lnf_g': jnp.ones((D,), jnp.float32),
        'lnf_b': jnp.zeros((D,), jnp.float32),
        # head: Linear(D, OUT, bias=False), xavier_normal-style scale
        'head_w': (2.0 / (D + OUT)) ** 0.5 * jax.random.normal(next(ks), (OUT, D), jnp.float32),
        'layers': [],
    }
    for _ in range(LAYERS):
        p['layers'].append({
            'ln1_g': jnp.ones((D,), jnp.float32),
            'ln1_b': jnp.zeros((D,), jnp.float32),
            'in_proj_w': 0.05 * jax.random.normal(next(ks), (3 * D, D), jnp.float32),
            'in_proj_b': jnp.zeros((3 * D,), jnp.float32),
            'out_w': 0.05 * jax.random.normal(next(ks), (D, D), jnp.float32),
            'out_b': jnp.zeros((D,), jnp.float32),
            'ln2_g': jnp.ones((D,), jnp.float32),
            'ln2_b': jnp.zeros((D,), jnp.float32),
            'fc1_w': 0.05 * jax.random.normal(next(ks), (MLP, D), jnp.float32),
            'fc1_b': jnp.zeros((MLP,), jnp.float32),
            'fc2_w': 0.05 * jax.random.normal(next(ks), (D, MLP), jnp.float32),
            'fc2_b': jnp.zeros((D,), jnp.float32),
        })
    return p


def prepare_params(params, batch=B):
    """One-time host prep: pack everything into two slabs.
    - bf16 weight slab: (K,N)-transposed weights, 1/sqrt(DH) folded into Q rows.
    - f32 vector slab: fused cls/pos/conv-bias addend, LN/bias vectors, key mask."""
    scale = 1.0 / float(DH) ** 0.5

    def padw(w):                                   # (K, N) -> (K, LANES)
        return jnp.pad(w, ((0, 0), (0, LANES - w.shape[1])))

    def padv(v):                                   # (width,) -> (1, LANES)
        v = v.reshape(1, -1)
        return jnp.pad(v, ((0, 0), (0, LANES - v.shape[1])))

    wrows = [padw(params['conv_w'].T)]
    vrows = []
    # additive term: row0 = cls+pos0, rows 1..S-1 = pos_i + conv_b, pad rows = 0
    seq_add = jnp.zeros((S_PAD, D), jnp.float32)
    seq_add = seq_add.at[0].set(params['cls'][0, 0] + params['pos'][0, 0])
    seq_add = seq_add.at[1:S].set(params['pos'][0, 1:S] + params['conv_b'][None, :])
    addend = jnp.tile(seq_add, (batch, 1))                              # (batch*S_PAD, D)
    vrows.append(jnp.pad(addend, ((0, 0), (0, LANES - D))))

    for lp in params['layers']:
        w_qkv = lp['in_proj_w'].at[:D].multiply(scale)                  # scale Q rows
        b_qkv = lp['in_proj_b'].at[:D].multiply(scale)
        wrows += [padw(w_qkv.T), padw(lp['out_w'].T),
                  padw(lp['fc1_w'].T), padw(lp['fc2_w'].T)]
        vrows += [padv(lp['ln1_g']), padv(lp['ln1_b']), padv(b_qkv), padv(lp['out_b']),
                  padv(lp['ln2_g']), padv(lp['ln2_b']), padv(lp['fc1_b']), padv(lp['fc2_b'])]
    wrows.append(padw(params['head_w'].T))
    vrows += [padv(params['lnf_g']), padv(params['lnf_b'])]
    maskrow = jnp.zeros((1, LANES), jnp.float32).at[0, S:S_PAD].set(_NEG_INF)
    vrows.append(maskrow)

    w_slab = jnp.concatenate(wrows, axis=0).astype(jnp.bfloat16)        # (W_ROWS, 128)
    v_slab = jnp.concatenate(vrows, axis=0).astype(jnp.float32)
    return {'w_slab': w_slab, 'v_slab': v_slab}


# ------------------------------ forward -------------------------------------
def _vmem_full_spec(shape):
    nd = len(shape)
    return pl.BlockSpec(shape, lambda i, _nd=nd: (0,) * _nd)


def vit_age_forward(prep, x):
    """x: (B, C, IMG, IMG) NCHW float32 -> (B, OUT). Single fused pallas_call."""
    b, c, hgt, wdt = x.shape
    nh_, nw_ = hgt // PATCH, wdt // PATCH
    assert prep['w_slab'].shape == (W_ROWS, LANES)
    assert prep['v_slab'].shape[0] == b * S_PAD + LAYERS * V_PER_LAYER + 3

    # NCHW -> (B*S_PAD, C*P*P) patch matrix with zero rows at CLS/pad positions
    # (pure layout glue; the conv matmul itself happens inside the kernel).
    patches = x.reshape(b, c, nh_, PATCH, nw_, PATCH)
    patches = patches.transpose(0, 2, 4, 1, 3, 5).reshape(b, nh_ * nw_, c * PATCH * PATCH)
    zrow = jnp.zeros((b, 1, c * PATCH * PATCH), patches.dtype)
    zpad = jnp.zeros((b, S_PAD - S, c * PATCH * PATCH), patches.dtype)
    patches_full = jnp.concatenate([zrow, patches, zpad], axis=1)
    patches_full = patches_full.reshape(b * S_PAD, c * PATCH * PATCH).astype(jnp.bfloat16)

    kernel = functools.partial(_vit_fused_kernel, batch=b)
    return pl.pallas_call(
        kernel,
        grid=(1,),
        in_specs=[_vmem_full_spec(patches_full.shape),
                  _vmem_full_spec(prep['w_slab'].shape),
                  _vmem_full_spec(prep['v_slab'].shape)],
        out_specs=_vmem_full_spec((b, OUT)),
        out_shape=jax.ShapeDtypeStruct((b, OUT), jnp.float32),
        compiler_params=pltpu.CompilerParams(dimension_semantics=("arbitrary",)),
    )(patches_full, prep['w_slab'], prep['v_slab'])


if __name__ == "__main__":
    key = jax.random.PRNGKey(0)
    pkey, xkey = jax.random.split(key)
    params = init_params(pkey)
    prep = prepare_params(params, batch=B)
    x = jax.random.normal(xkey, (B, C, IMG, IMG), jnp.float32)

    fwd = jax.jit(vit_age_forward)
    y = fwd(prep, x)
    jax.block_until_ready(y)
    assert y.shape == (B, OUT) and y.dtype == jnp.float32
    assert bool(jnp.all(jnp.isfinite(y)))
    print("KERNEL_OK")
</pallas_src>

<mosaic_0001>
module attributes {stable_mosaic.version = 11 : i64} {
  func.func @_vit_fused_kernel(%arg0: i32, %arg1: memref<16x192xbf16, #tpu.memory_space<vmem>>, %arg2: memref<544x128xbf16, #tpu.memory_space<vmem>>, %arg3: memref<35x128xf32, #tpu.memory_space<vmem>>, %arg4: memref<2x64xf32, #tpu.memory_space<vmem>>) attributes {dimension_semantics = [#tpu.dimension_semantics<arbitrary>], iteration_bounds = array<i64: 1>, scalar_prefetch = 0 : i64, scratch_operands = 0 : i64, tpu.core_type = #tpu.core_type<tc>, window_params = [{pipeline_mode = #tpu.pipeline_mode<synchronous>, transform_indices = @transform_0, window_bounds = array<i64: 16, 192>}, {pipeline_mode = #tpu.pipeline_mode<synchronous>, transform_indices = @transform_1, window_bounds = array<i64: 544, 128>}, {pipeline_mode = #tpu.pipeline_mode<synchronous>, transform_indices = @transform_2, window_bounds = array<i64: 35, 128>}, {pipeline_mode = #tpu.pipeline_mode<synchronous>, transform_indices = @transform_3, window_bounds = array<i64: 2, 64>}]} {
    %c0 = arith.constant 0 : index
    %c0_0 = arith.constant 0 : index
    %0 = vector.load %arg1[%c0, %c0_0] : memref<16x192xbf16, #tpu.memory_space<vmem>>, vector<16x192xbf16>
    %c0_1 = arith.constant 0 : index
    %c0_2 = arith.constant 0 : index
    %1 = vector.load %arg2[%c0_1, %c0_2] : memref<544x128xbf16, #tpu.memory_space<vmem>>, vector<192x32xbf16>
    %cst = arith.constant dense<0.000000e+00> : vector<16x32xf32>
    %2 = tpu.matmul %0, %1, %cst {dimension_numbers = #tpu.dot_dimension_numbers<[1], [0], [0], [1], [0, 0, 1, 1], [], []>} : vector<16x192xbf16>, vector<192x32xbf16>, vector<16x32xf32> -> vector<16x32xf32>
    %c0_3 = arith.constant 0 : index
    %c0_4 = arith.constant 0 : index
    %3 = vector.load %arg3[%c0_3, %c0_4] : memref<35x128xf32, #tpu.memory_space<vmem>>, vector<16x32xf32>
    %4 = arith.addf %2, %3 : vector<16x32xf32>
    %c34 = arith.constant 34 : index
    %c0_5 = arith.constant 0 : index
    %5 = vector.load %arg3[%c34, %c0_5] : memref<35x128xf32, #tpu.memory_space<vmem>>, vector<1x8xf32>
    %c16 = arith.constant 16 : index
    %c0_6 = arith.constant 0 : index
    %6 = vector.load %arg3[%c16, %c0_6] : memref<35x128xf32, #tpu.memory_space<vmem>>, vector<1x32xf32>
    %c17 = arith.constant 17 : index
    %c0_7 = arith.constant 0 : index
    %7 = vector.load %arg3[%c17, %c0_7] : memref<35x128xf32, #tpu.memory_space<vmem>>, vector<1x32xf32>
    %cst_8 = arith.constant dense<0.000000e+00> : vector<16xf32>
    %8 = vector.multi_reduction <add>, %4, %cst_8 [1] : vector<16x32xf32> to vector<16xf32>
    %9 = vector.shape_cast %8 : vector<16xf32> to vector<16x1xf32>
    %cst_9 = arith.constant 3.200000e+01 : f32
    %10 = vector.broadcast %cst_9 : f32 to vector<16x1xf32>
    %11 = arith.divf %9, %10 : vector<16x1xf32>
    %12 = vector.broadcast %11 : vector<16x1xf32> to vector<16x32xf32>
    %13 = arith.subf %4, %12 : vector<16x32xf32>
    %14 = arith.mulf %13, %13 : vector<16x32xf32>
    %cst_10 = arith.constant dense<0.000000e+00> : vector<16xf32>
    %15 = vector.multi_reduction <add>, %14, %cst_10 [1] : vector<16x32xf32> to vector<16xf32>
    %16 = vector.shape_cast %15 : vector<16xf32> to vector<16x1xf32>
    %cst_11 = arith.constant 3.200000e+01 : f32
    %17 = vector.broadcast %cst_11 : f32 to vector<16x1xf32>
    %18 = arith.divf %16, %17 : vector<16x1xf32>
    %cst_12 = arith.constant 9.99999997E-7 : f32
    %19 = vector.broadcast %cst_12 : f32 to vector<16x1xf32>
    %20 = arith.addf %18, %19 : vector<16x1xf32>
    %21 = math.rsqrt %20 : vector<16x1xf32>
    %22 = vector.broadcast %21 : vector<16x1xf32> to vector<16x32xf32>
    %23 = arith.mulf %13, %22 : vector<16x32xf32>
    %24 = vector.broadcast %6 : vector<1x32xf32> to vector<16x32xf32>
    %25 = arith.mulf %23, %24 : vector<16x32xf32>
    %26 = vector.broadcast %7 : vector<1x32xf32> to vector<16x32xf32>
    %27 = arith.addf %25, %26 : vector<16x32xf32>
    %c192 = arith.constant 192 : index
    %c0_13 = arith.constant 0 : index
    %28 = vector.load %arg2[%c192, %c0_13] : memref<544x128xbf16, #tpu.memory_space<vmem>>, vector<32x96xbf16>
    %29 = arith.truncf %27 : vector<16x32xf32> to vector<16x32xbf16>
    %cst_14 = arith.constant dense<0.000000e+00> : vector<16x96xf32>
    %30 = tpu.matmul %29, %28, %cst_14 {dimension_numbers = #tpu.dot_dimension_numbers<[1], [0], [0], [1], [0, 0, 1, 1], [], []>} : vector<16x32xbf16>, vector<32x96xbf16>, vector<16x96xf32> -> vector<16x96xf32>
    %c18 = arith.constant 18 : index
    %c0_15 = arith.constant 0 : index
    %31 = vector.load %arg3[%c18, %c0_15] : memref<35x128xf32, #tpu.memory_space<vmem>>, vector<1x96xf32>
    %32 = vector.broadcast %31 : vector<1x96xf32> to vector<16x96xf32>
    %33 = arith.addf %30, %32 : vector<16x96xf32>
    %34 = vector.extract_strided_slice %33 {offsets = [0, 0], sizes = [16, 32], strides = [1, 1]} : vector<16x96xf32> to vector<16x32xf32>
    %35 = vector.shape_cast %34 : vector<16x32xf32> to vector<2x8x32xf32>
    %36 = vector.extract_strided_slice %33 {offsets = [0, 32], sizes = [16, 32], strides = [1, 1]} : vector<16x96xf32> to vector<16x32xf32>
    %37 = vector.shape_cast %36 : vector<16x32xf32> to vector<2x8x32xf32>
    %38 = vector.extract_strided_slice %33 {offsets = [0, 64], sizes = [16, 32], strides = [1, 1]} : vector<16x96xf32> to vector<16x32xf32>
    %39 = vector.shape_cast %38 : vector<16x32xf32> to vector<2x8x32xf32>
    %40 = vector.extract_strided_slice %35 {offsets = [0, 0, 0], sizes = [2, 8, 8], strides = [1, 1, 1]} : vector<2x8x32xf32> to vector<2x8x8xf32>
    %41 = vector.extract_strided_slice %35 {offsets = [0, 0, 8], sizes = [2, 8, 8], strides = [1, 1, 1]} : vector<2x8x32xf32> to vector<2x8x8xf32>
    %42 = vector.extract_strided_slice %35 {offsets = [0, 0, 16], sizes = [2, 8, 8], strides = [1, 1, 1]} : vector<2x8x32xf32> to vector<2x8x8xf32>
    %43 = vector.extract_strided_slice %35 {offsets = [0, 0, 24], sizes = [2, 8, 8], strides = [1, 1, 1]} : vector<2x8x32xf32> to vector<2x8x8xf32>
    %44 = tpu.concatenate %40, %41, %42, %43 in 0 : vector<2x8x8xf32>, vector<2x8x8xf32>, vector<2x8x8xf32>, vector<2x8x8xf32> -> vector<8x8x8xf32>
    %45 = arith.truncf %44 : vector<8x8x8xf32> to vector<8x8x8xbf16>
    %46 = vector.extract_strided_slice %37 {offsets = [0, 0, 0], sizes = [2, 8, 8], strides = [1, 1, 1]} : vector<2x8x32xf32> to vector<2x8x8xf32>
    %47 = vector.extract_strided_slice %37 {offsets = [0, 0, 8], sizes = [2, 8, 8], strides = [1, 1, 1]} : vector<2x8x32xf32> to vector<2x8x8xf32>
    %48 = vector.extract_strided_slice %37 {offsets = [0, 0, 16], sizes = [2, 8, 8], strides = [1, 1, 1]} : vector<2x8x32xf32> to vector<2x8x8xf32>
    %49 = vector.extract_strided_slice %37 {offsets = [0, 0, 24], sizes = [2, 8, 8], strides = [1, 1, 1]} : vector<2x8x32xf32> to vector<2x8x8xf32>
    %50 = tpu.concatenate %46, %47, %48, %49 in 0 : vector<2x8x8xf32>, vector<2x8x8xf32>, vector<2x8x8xf32>, vector<2x8x8xf32> -> vector<8x8x8xf32>
    %51 = arith.truncf %50 : vector<8x8x8xf32> to vector<8x8x8xbf16>
    %52 = vector.extract_strided_slice %39 {offsets = [0, 0, 0], sizes = [2, 8, 8], strides = [1, 1, 1]} : vector<2x8x32xf32> to vector<2x8x8xf32>
    %53 = vector.extract_strided_slice %39 {offsets = [0, 0, 8], sizes = [2, 8, 8], strides = [1, 1, 1]} : vector<2x8x32xf32> to vector<2x8x8xf32>
    %54 = vector.extract_strided_slice %39 {offsets = [0, 0, 16], sizes = [2, 8, 8], strides = [1, 1, 1]} : vector<2x8x32xf32> to vector<2x8x8xf32>
    %55 = vector.extract_strided_slice %39 {offsets = [0, 0, 24], sizes = [2, 8, 8], strides = [1, 1, 1]} : vector<2x8x32xf32> to vector<2x8x8xf32>
    %56 = tpu.concatenate %52, %53, %54, %55 in 0 : vector<2x8x8xf32>, vector<2x8x8xf32>, vector<2x8x8xf32>, vector<2x8x8xf32> -> vector<8x8x8xf32>
    %57 = arith.truncf %56 : vector<8x8x8xf32> to vector<8x8x8xbf16>
    "tpu.trace_start"() <{level = 10 : i32, message = "bqd,bkd->bqk"}> : () -> ()
    %cst_16 = arith.constant dense<0.000000e+00> : vector<8x8x8xf32>
    %58 = tpu.matmul %45, %51, %cst_16 {dimension_numbers = #tpu.dot_dimension_numbers<[2], [2], [1], [1], [0, 0, 0, 1, 1, 1], [0], [0]>} : vector<8x8x8xbf16>, vector<8x8x8xbf16>, vector<8x8x8xf32> -> vector<8x8x8xf32>
    "tpu.trace_stop"() : () -> ()
    %59 = vector.shape_cast %5 : vector<1x8xf32> to vector<1x1x8xf32>
    %60 = vector.broadcast %59 : vector<1x1x8xf32> to vector<8x8x8xf32>
    %61 = arith.addf %58, %60 : vector<8x8x8xf32>
    %cst_17 = arith.constant dense<0xFF800000> : vector<8x8xf32>
    %62 = vector.multi_reduction <maximumf>, %61, %cst_17 [2] : vector<8x8x8xf32> to vector<8x8xf32>
    %63 = vector.shape_cast %62 : vector<8x8xf32> to vector<8x8x1xf32>
    %64 = vector.broadcast %63 : vector<8x8x1xf32> to vector<8x8x8xf32>
    %65 = arith.subf %61, %64 : vector<8x8x8xf32>
    %66 = math.exp %65 : vector<8x8x8xf32>
    %cst_18 = arith.constant dense<0.000000e+00> : vector<8x8xf32>
    %67 = vector.multi_reduction <add>, %66, %cst_18 [2] : vector<8x8x8xf32> to vector<8x8xf32>
    %68 = vector.shape_cast %67 : vector<8x8xf32> to vector<8x8x1xf32>
    %69 = tpu.reciprocal %68 {approx = true} : vector<8x8x1xf32> -> vector<8x8x1xf32>
    %70 = vector.broadcast %69 : vector<8x8x1xf32> to vector<8x8x8xf32>
    %71 = arith.mulf %66, %70 : vector<8x8x8xf32>
    %72 = arith.truncf %71 : vector<8x8x8xf32> to vector<8x8x8xbf16>
    "tpu.trace_start"() <{level = 10 : i32, message = "bqk,bkd->bqd"}> : () -> ()
    %cst_19 = arith.constant dense<0.000000e+00> : vector<8x8x8xf32>
    %73 = tpu.matmul %72, %57, %cst_19 {dimension_numbers = #tpu.dot_dimension_numbers<[2], [1], [1], [2], [0, 0, 0, 1, 1, 2], [0], [0]>} : vector<8x8x8xbf16>, vector<8x8x8xbf16>, vector<8x8x8xf32> -> vector<8x8x8xf32>
    "tpu.trace_stop"() : () -> ()
    %74 = vector.extract_strided_slice %73 {offsets = [0, 0, 0], sizes = [2, 8, 8], strides = [1, 1, 1]} : vector<8x8x8xf32> to vector<2x8x8xf32>
    %75 = vector.extract_strided_slice %73 {offsets = [2, 0, 0], sizes = [2, 8, 8], strides = [1, 1, 1]} : vector<8x8x8xf32> to vector<2x8x8xf32>
    %76 = vector.extract_strided_slice %73 {offsets = [4, 0, 0], sizes = [2, 8, 8], strides = [1, 1, 1]} : vector<8x8x8xf32> to vector<2x8x8xf32>
    %77 = vector.extract_strided_slice %73 {offsets = [6, 0, 0], sizes = [2, 8, 8], strides = [1, 1, 1]} : vector<8x8x8xf32> to vector<2x8x8xf32>
    %78 = tpu.concatenate %74, %75, %76, %77 in 2 : vector<2x8x8xf32>, vector<2x8x8xf32>, vector<2x8x8xf32>, vector<2x8x8xf32> -> vector<2x8x32xf32>
    %79 = vector.shape_cast %78 : vector<2x8x32xf32> to vector<16x32xf32>
    %c224 = arith.constant 224 : index
    %c0_20 = arith.constant 0 : index
    %80 = vector.load %arg2[%c224, %c0_20] : memref<544x128xbf16, #tpu.memory_space<vmem>>, vector<32x32xbf16>
    %81 = arith.truncf %79 : vector<16x32xf32> to vector<16x32xbf16>
    %cst_21 = arith.constant dense<0.000000e+00> : vector<16x32xf32>
    %82 = tpu.matmul %81, %80, %cst_21 {dimension_numbers = #tpu.dot_dimension_numbers<[1], [0], [0], [1], [0, 0, 1, 1], [], []>} : vector<16x32xbf16>, vector<32x32xbf16>, vector<16x32xf32> -> vector<16x32xf32>
    %c19 = arith.constant 19 : index
    %c0_22 = arith.constant 0 : index
    %83 = vector.load %arg3[%c19, %c0_22] : memref<35x128xf32, #tpu.memory_space<vmem>>, vector<1x32xf32>
    %84 = vector.broadcast %83 : vector<1x32xf32> to vector<16x32xf32>
    %85 = arith.addf %82, %84 : vector<16x32xf32>
    %86 = arith.addf %85, %4 : vector<16x32xf32>
    %c20 = arith.constant 20 : index
    %c0_23 = arith.constant 0 : index
    %87 = vector.load %arg3[%c20, %c0_23] : memref<35x128xf32, #tpu.memory_space<vmem>>, vector<1x32xf32>
    %c21 = arith.constant 21 : index
    %c0_24 = arith.constant 0 : index
    %88 = vector.load %arg3[%c21, %c0_24] : memref<35x128xf32, #tpu.memory_space<vmem>>, vector<1x32xf32>
    %cst_25 = arith.constant dense<0.000000e+00> : vector<16xf32>
    %89 = vector.multi_reduction <add>, %86, %cst_25 [1] : vector<16x32xf32> to vector<16xf32>
    %90 = vector.shape_cast %89 : vector<16xf32> to vector<16x1xf32>
    %cst_26 = arith.constant 3.200000e+01 : f32
    %91 = vector.broadcast %cst_26 : f32 to vector<16x1xf32>
    %92 = arith.divf %90, %91 : vector<16x1xf32>
    %93 = vector.broadcast %92 : vector<16x1xf32> to vector<16x32xf32>
    %94 = arith.subf %86, %93 : vector<16x32xf32>
    %95 = arith.mulf %94, %94 : vector<16x32xf32>
    %cst_27 = arith.constant dense<0.000000e+00> : vector<16xf32>
    %96 = vector.multi_reduction <add>, %95, %cst_27 [1] : vector<16x32xf32> to vector<16xf32>
    %97 = vector.shape_cast %96 : vector<16xf32> to vector<16x1xf32>
    %cst_28 = arith.constant 3.200000e+01 : f32
    %98 = vector.broadcast %cst_28 : f32 to vector<16x1xf32>
    %99 = arith.divf %97, %98 : vector<16x1xf32>
    %cst_29 = arith.constant 9.99999997E-7 : f32
    %100 = vector.broadcast %cst_29 : f32 to vector<16x1xf32>
    %101 = arith.addf %99, %100 : vector<16x1xf32>
    %102 = math.rsqrt %101 : vector<16x1xf32>
    %103 = vector.broadcast %102 : vector<16x1xf32> to vector<16x32xf32>
    %104 = arith.mulf %94, %103 : vector<16x32xf32>
    %105 = vector.broadcast %87 : vector<1x32xf32> to vector<16x32xf32>
    %106 = arith.mulf %104, %105 : vector<16x32xf32>
    %107 = vector.broadcast %88 : vector<1x32xf32> to vector<16x32xf32>
    %108 = arith.addf %106, %107 : vector<16x32xf32>
    %c256 = arith.constant 256 : index
    %c0_30 = arith.constant 0 : index
    %109 = vector.load %arg2[%c256, %c0_30] : memref<544x128xbf16, #tpu.memory_space<vmem>>, vector<32x64xbf16>
    %110 = arith.truncf %108 : vector<16x32xf32> to vector<16x32xbf16>
    %cst_31 = arith.constant dense<0.000000e+00> : vector<16x64xf32>
    %111 = tpu.matmul %110, %109, %cst_31 {dimension_numbers = #tpu.dot_dimension_numbers<[1], [0], [0], [1], [0, 0, 1, 1], [], []>} : vector<16x32xbf16>, vector<32x64xbf16>, vector<16x64xf32> -> vector<16x64xf32>
    %c22 = arith.constant 22 : index
    %c0_32 = arith.constant 0 : index
    %112 = vector.load %arg3[%c22, %c0_32] : memref<35x128xf32, #tpu.memory_space<vmem>>, vector<1x64xf32>
    %113 = vector.broadcast %112 : vector<1x64xf32> to vector<16x64xf32>
    %114 = arith.addf %111, %113 : vector<16x64xf32>
    %cst_33 = arith.constant 5.000000e-01 : f32
    %115 = vector.broadcast %cst_33 : f32 to vector<16x64xf32>
    %116 = arith.mulf %115, %114 : vector<16x64xf32>
    %cst_34 = arith.constant 0.707106769 : f32
    %117 = vector.broadcast %cst_34 : f32 to vector<16x64xf32>
    %118 = arith.mulf %114, %117 : vector<16x64xf32>
    %119 = math.erf %118 : vector<16x64xf32>
    %cst_35 = arith.constant 1.000000e+00 : f32
    %120 = vector.broadcast %cst_35 : f32 to vector<16x64xf32>
    %121 = arith.addf %120, %119 : vector<16x64xf32>
    %122 = arith.mulf %116, %121 : vector<16x64xf32>
    %c288 = arith.constant 288 : index
    %c0_36 = arith.constant 0 : index
    %123 = vector.load %arg2[%c288, %c0_36] : memref<544x128xbf16, #tpu.memory_space<vmem>>, vector<64x32xbf16>
    %124 = arith.truncf %122 : vector<16x64xf32> to vector<16x64xbf16>
    %cst_37 = arith.constant dense<0.000000e+00> : vector<16x32xf32>
    %125 = tpu.matmul %124, %123, %cst_37 {dimension_numbers = #tpu.dot_dimension_numbers<[1], [0], [0], [1], [0, 0, 1, 1], [], []>} : vector<16x64xbf16>, vector<64x32xbf16>, vector<16x32xf32> -> vector<16x32xf32>
    %c23 = arith.constant 23 : index
    %c0_38 = arith.constant 0 : index
    %126 = vector.load %arg3[%c23, %c0_38] : memref<35x128xf32, #tpu.memory_space<vmem>>, vector<1x32xf32>
    %127 = vector.broadcast %126 : vector<1x32xf32> to vector<16x32xf32>
    %128 = arith.addf %125, %127 : vector<16x32xf32>
    %129 = arith.addf %128, %86 : vector<16x32xf32>
    %c24 = arith.constant 24 : index
    %c0_39 = arith.constant 0 : index
    %130 = vector.load %arg3[%c24, %c0_39] : memref<35x128xf32, #tpu.memory_space<vmem>>, vector<1x32xf32>
    %c25 = arith.constant 25 : index
    %c0_40 = arith.constant 0 : index
    %131 = vector.load %arg3[%c25, %c0_40] : memref<35x128xf32, #tpu.memory_space<vmem>>, vector<1x32xf32>
    %cst_41 = arith.constant dense<0.000000e+00> : vector<16xf32>
    %132 = vector.multi_reduction <add>, %129, %cst_41 [1] : vector<16x32xf32> to vector<16xf32>
    %133 = vector.shape_cast %132 : vector<16xf32> to vector<16x1xf32>
    %cst_42 = arith.constant 3.200000e+01 : f32
    %134 = vector.broadcast %cst_42 : f32 to vector<16x1xf32>
    %135 = arith.divf %133, %134 : vector<16x1xf32>
    %136 = vector.broadcast %135 : vector<16x1xf32> to vector<16x32xf32>
    %137 = arith.subf %129, %136 : vector<16x32xf32>
    %138 = arith.mulf %137, %137 : vector<16x32xf32>
    %cst_43 = arith.constant dense<0.000000e+00> : vector<16xf32>
    %139 = vector.multi_reduction <add>, %138, %cst_43 [1] : vector<16x32xf32> to vector<16xf32>
    %140 = vector.shape_cast %139 : vector<16xf32> to vector<16x1xf32>
    %cst_44 = arith.constant 3.200000e+01 : f32
    %141 = vector.broadcast %cst_44 : f32 to vector<16x1xf32>
    %142 = arith.divf %140, %141 : vector<16x1xf32>
    %cst_45 = arith.constant 9.99999997E-7 : f32
    %143 = vector.broadcast %cst_45 : f32 to vector<16x1xf32>
    %144 = arith.addf %142, %143 : vector<16x1xf32>
    %145 = math.rsqrt %144 : vector<16x1xf32>
    %146 = vector.broadcast %145 : vector<16x1xf32> to vector<16x32xf32>
    %147 = arith.mulf %137, %146 : vector<16x32xf32>
    %148 = vector.broadcast %130 : vector<1x32xf32> to vector<16x32xf32>
    %149 = arith.mulf %147, %148 : vector<16x32xf32>
    %150 = vector.broadcast %131 : vector<1x32xf32> to vector<16x32xf32>
    %151 = arith.addf %149, %150 : vector<16x32xf32>
    %c352 = arith.constant 352 : index
    %c0_46 = arith.constant 0 : index
    %152 = vector.load %arg2[%c352, %c0_46] : memref<544x128xbf16, #tpu.memory_space<vmem>>, vector<32x96xbf16>
    %153 = arith.truncf %151 : vector<16x32xf32> to vector<16x32xbf16>
    %cst_47 = arith.constant dense<0.000000e+00> : vector<16x96xf32>
    %154 = tpu.matmul %153, %152, %cst_47 {dimension_numbers = #tpu.dot_dimension_numbers<[1], [0], [0], [1], [0, 0, 1, 1], [], []>} : vector<16x32xbf16>, vector<32x96xbf16>, vector<16x96xf32> -> vector<16x96xf32>
    %c26 = arith.constant 26 : index
    %c0_48 = arith.constant 0 : index
    %155 = vector.load %arg3[%c26, %c0_48] : memref<35x128xf32, #tpu.memory_space<vmem>>, vector<1x96xf32>
    %156 = vector.broadcast %155 : vector<1x96xf32> to vector<16x96xf32>
    %157 = arith.addf %154, %156 : vector<16x96xf32>
    %158 = vector.extract_strided_slice %157 {offsets = [0, 0], sizes = [16, 32], strides = [1, 1]} : vector<16x96xf32> to vector<16x32xf32>
    %159 = vector.shape_cast %158 : vector<16x32xf32> to vector<2x8x32xf32>
    %160 = vector.extract_strided_slice %157 {offsets = [0, 32], sizes = [16, 32], strides = [1, 1]} : vector<16x96xf32> to vector<16x32xf32>
    %161 = vector.shape_cast %160 : vector<16x32xf32> to vector<2x8x32xf32>
    %162 = vector.extract_strided_slice %157 {offsets = [0, 64], sizes = [16, 32], strides = [1, 1]} : vector<16x96xf32> to vector<16x32xf32>
    %163 = vector.shape_cast %162 : vector<16x32xf32> to vector<2x8x32xf32>
    %164 = vector.extract_strided_slice %159 {offsets = [0, 0, 0], sizes = [2, 8, 8], strides = [1, 1, 1]} : vector<2x8x32xf32> to vector<2x8x8xf32>
    %165 = vector.extract_strided_slice %159 {offsets = [0, 0, 8], sizes = [2, 8, 8], strides = [1, 1, 1]} : vector<2x8x32xf32> to vector<2x8x8xf32>
    %166 = vector.extract_strided_slice %159 {offsets = [0, 0, 16], sizes = [2, 8, 8], strides = [1, 1, 1]} : vector<2x8x32xf32> to vector<2x8x8xf32>
    %167 = vector.extract_strided_slice %159 {offsets = [0, 0, 24], sizes = [2, 8, 8], strides = [1, 1, 1]} : vector<2x8x32xf32> to vector<2x8x8xf32>
    %168 = tpu.concatenate %164, %165, %166, %167 in 0 : vector<2x8x8xf32>, vector<2x8x8xf32>, vector<2x8x8xf32>, vector<2x8x8xf32> -> vector<8x8x8xf32>
    %169 = arith.truncf %168 : vector<8x8x8xf32> to vector<8x8x8xbf16>
    %170 = vector.extract_strided_slice %161 {offsets = [0, 0, 0], sizes = [2, 8, 8], strides = [1, 1, 1]} : vector<2x8x32xf32> to vector<2x8x8xf32>
    %171 = vector.extract_strided_slice %161 {offsets = [0, 0, 8], sizes = [2, 8, 8], strides = [1, 1, 1]} : vector<2x8x32xf32> to vector<2x8x8xf32>
    %172 = vector.extract_strided_slice %161 {offsets = [0, 0, 16], sizes = [2, 8, 8], strides = [1, 1, 1]} : vector<2x8x32xf32> to vector<2x8x8xf32>
    %173 = vector.extract_strided_slice %161 {offsets = [0, 0, 24], sizes = [2, 8, 8], strides = [1, 1, 1]} : vector<2x8x32xf32> to vector<2x8x8xf32>
    %174 = tpu.concatenate %170, %171, %172, %173 in 0 : vector<2x8x8xf32>, vector<2x8x8xf32>, vector<2x8x8xf32>, vector<2x8x8xf32> -> vector<8x8x8xf32>
    %175 = arith.truncf %174 : vector<8x8x8xf32> to vector<8x8x8xbf16>
    %176 = vector.extract_strided_slice %163 {offsets = [0, 0, 0], sizes = [2, 8, 8], strides = [1, 1, 1]} : vector<2x8x32xf32> to vector<2x8x8xf32>
    %177 = vector.extract_strided_slice %163 {offsets = [0, 0, 8], sizes = [2, 8, 8], strides = [1, 1, 1]} : vector<2x8x32xf32> to vector<2x8x8xf32>
    %178 = vector.extract_strided_slice %163 {offsets = [0, 0, 16], sizes = [2, 8, 8], strides = [1, 1, 1]} : vector<2x8x32xf32> to vector<2x8x8xf32>
    %179 = vector.extract_strided_slice %163 {offsets = [0, 0, 24], sizes = [2, 8, 8], strides = [1, 1, 1]} : vector<2x8x32xf32> to vector<2x8x8xf32>
    %180 = tpu.concatenate %176, %177, %178, %179 in 0 : vector<2x8x8xf32>, vector<2x8x8xf32>, vector<2x8x8xf32>, vector<2x8x8xf32> -> vector<8x8x8xf32>
    %181 = arith.truncf %180 : vector<8x8x8xf32> to vector<8x8x8xbf16>
    "tpu.trace_start"() <{level = 10 : i32, message = "bqd,bkd->bqk"}> : () -> ()
    %cst_49 = arith.constant dense<0.000000e+00> : vector<8x8x8xf32>
    %182 = tpu.matmul %169, %175, %cst_49 {dimension_numbers = #tpu.dot_dimension_numbers<[2], [2], [1], [1], [0, 0, 0, 1, 1, 1], [0], [0]>} : vector<8x8x8xbf16>, vector<8x8x8xbf16>, vector<8x8x8xf32> -> vector<8x8x8xf32>
    "tpu.trace_stop"() : () -> ()
    %183 = vector.shape_cast %5 : vector<1x8xf32> to vector<1x1x8xf32>
    %184 = vector.broadcast %183 : vector<1x1x8xf32> to vector<8x8x8xf32>
    %185 = arith.addf %182, %184 : vector<8x8x8xf32>
    %cst_50 = arith.constant dense<0xFF800000> : vector<8x8xf32>
    %186 = vector.multi_reduction <maximumf>, %185, %cst_50 [2] : vector<8x8x8xf32> to vector<8x8xf32>
    %187 = vector.shape_cast %186 : vector<8x8xf32> to vector<8x8x1xf32>
    %188 = vector.broadcast %187 : vector<8x8x1xf32> to vector<8x8x8xf32>
    %189 = arith.subf %185, %188 : vector<8x8x8xf32>
    %190 = math.exp %189 : vector<8x8x8xf32>
    %cst_51 = arith.constant dense<0.000000e+00> : vector<8x8xf32>
    %191 = vector.multi_reduction <add>, %190, %cst_51 [2] : vector<8x8x8xf32> to vector<8x8xf32>
    %192 = vector.shape_cast %191 : vector<8x8xf32> to vector<8x8x1xf32>
    %193 = tpu.reciprocal %192 {approx = true} : vector<8x8x1xf32> -> vector<8x8x1xf32>
    %194 = vector.broadcast %193 : vector<8x8x1xf32> to vector<8x8x8xf32>
    %195 = arith.mulf %190, %194 : vector<8x8x8xf32>
    %196 = arith.truncf %195 : vector<8x8x8xf32> to vector<8x8x8xbf16>
    "tpu.trace_start"() <{level = 10 : i32, message = "bqk,bkd->bqd"}> : () -> ()
    %cst_52 = arith.constant dense<0.000000e+00> : vector<8x8x8xf32>
    %197 = tpu.matmul %196, %181, %cst_52 {dimension_numbers = #tpu.dot_dimension_numbers<[2], [1], [1], [2], [0, 0, 0, 1, 1, 2], [0], [0]>} : vector<8x8x8xbf16>, vector<8x8x8xbf16>, vector<8x8x8xf32> -> vector<8x8x8xf32>
    "tpu.trace_stop"() : () -> ()
    %198 = vector.extract_strided_slice %197 {offsets = [0, 0, 0], sizes = [2, 8, 8], strides = [1, 1, 1]} : vector<8x8x8xf32> to vector<2x8x8xf32>
    %199 = vector.extract_strided_slice %197 {offsets = [2, 0, 0], sizes = [2, 8, 8], strides = [1, 1, 1]} : vector<8x8x8xf32> to vector<2x8x8xf32>
    %200 = vector.extract_strided_slice %197 {offsets = [4, 0, 0], sizes = [2, 8, 8], strides = [1, 1, 1]} : vector<8x8x8xf32> to vector<2x8x8xf32>
    %201 = vector.extract_strided_slice %197 {offsets = [6, 0, 0], sizes = [2, 8, 8], strides = [1, 1, 1]} : vector<8x8x8xf32> to vector<2x8x8xf32>
    %202 = tpu.concatenate %198, %199, %200, %201 in 2 : vector<2x8x8xf32>, vector<2x8x8xf32>, vector<2x8x8xf32>, vector<2x8x8xf32> -> vector<2x8x32xf32>
    %203 = vector.shape_cast %202 : vector<2x8x32xf32> to vector<16x32xf32>
    %c384 = arith.constant 384 : index
    %c0_53 = arith.constant 0 : index
    %204 = vector.load %arg2[%c384, %c0_53] : memref<544x128xbf16, #tpu.memory_space<vmem>>, vector<32x32xbf16>
    %205 = arith.truncf %203 : vector<16x32xf32> to vector<16x32xbf16>
    %cst_54 = arith.constant dense<0.000000e+00> : vector<16x32xf32>
    %206 = tpu.matmul %205, %204, %cst_54 {dimension_numbers = #tpu.dot_dimension_numbers<[1], [0], [0], [1], [0, 0, 1, 1], [], []>} : vector<16x32xbf16>, vector<32x32xbf16>, vector<16x32xf32> -> vector<16x32xf32>
    %c27 = arith.constant 27 : index
    %c0_55 = arith.constant 0 : index
    %207 = vector.load %arg3[%c27, %c0_55] : memref<35x128xf32, #tpu.memory_space<vmem>>, vector<1x32xf32>
    %208 = vector.broadcast %207 : vector<1x32xf32> to vector<16x32xf32>
    %209 = arith.addf %206, %208 : vector<16x32xf32>
    %210 = arith.addf %209, %129 : vector<16x32xf32>
    %c28 = arith.constant 28 : index
    %c0_56 = arith.constant 0 : index
    %211 = vector.load %arg3[%c28, %c0_56] : memref<35x128xf32, #tpu.memory_space<vmem>>, vector<1x32xf32>
    %c29 = arith.constant 29 : index
    %c0_57 = arith.constant 0 : index
    %212 = vector.load %arg3[%c29, %c0_57] : memref<35x128xf32, #tpu.memory_space<vmem>>, vector<1x32xf32>
    %cst_58 = arith.constant dense<0.000000e+00> : vector<16xf32>
    %213 = vector.multi_reduction <add>, %210, %cst_58 [1] : vector<16x32xf32> to vector<16xf32>
    %214 = vector.shape_cast %213 : vector<16xf32> to vector<16x1xf32>
    %cst_59 = arith.constant 3.200000e+01 : f32
    %215 = vector.broadcast %cst_59 : f32 to vector<16x1xf32>
    %216 = arith.divf %214, %215 : vector<16x1xf32>
    %217 = vector.broadcast %216 : vector<16x1xf32> to vector<16x32xf32>
    %218 = arith.subf %210, %217 : vector<16x32xf32>
    %219 = arith.mulf %218, %218 : vector<16x32xf32>
    %cst_60 = arith.constant dense<0.000000e+00> : vector<16xf32>
    %220 = vector.multi_reduction <add>, %219, %cst_60 [1] : vector<16x32xf32> to vector<16xf32>
    %221 = vector.shape_cast %220 : vector<16xf32> to vector<16x1xf32>
    %cst_61 = arith.constant 3.200000e+01 : f32
    %222 = vector.broadcast %cst_61 : f32 to vector<16x1xf32>
    %223 = arith.divf %221, %222 : vector<16x1xf32>
    %cst_62 = arith.constant 9.99999997E-7 : f32
    %224 = vector.broadcast %cst_62 : f32 to vector<16x1xf32>
    %225 = arith.addf %223, %224 : vector<16x1xf32>
    %226 = math.rsqrt %225 : vector<16x1xf32>
    %227 = vector.broadcast %226 : vector<16x1xf32> to vector<16x32xf32>
    %228 = arith.mulf %218, %227 : vector<16x32xf32>
    %229 = vector.broadcast %211 : vector<1x32xf32> to vector<16x32xf32>
    %230 = arith.mulf %228, %229 : vector<16x32xf32>
    %231 = vector.broadcast %212 : vector<1x32xf32> to vector<16x32xf32>
    %232 = arith.addf %230, %231 : vector<16x32xf32>
    %c416 = arith.constant 416 : index
    %c0_63 = arith.constant 0 : index
    %233 = vector.load %arg2[%c416, %c0_63] : memref<544x128xbf16, #tpu.memory_space<vmem>>, vector<32x64xbf16>
    %234 = arith.truncf %232 : vector<16x32xf32> to vector<16x32xbf16>
    %cst_64 = arith.constant dense<0.000000e+00> : vector<16x64xf32>
    %235 = tpu.matmul %234, %233, %cst_64 {dimension_numbers = #tpu.dot_dimension_numbers<[1], [0], [0], [1], [0, 0, 1, 1], [], []>} : vector<16x32xbf16>, vector<32x64xbf16>, vector<16x64xf32> -> vector<16x64xf32>
    %c30 = arith.constant 30 : index
    %c0_65 = arith.constant 0 : index
    %236 = vector.load %arg3[%c30, %c0_65] : memref<35x128xf32, #tpu.memory_space<vmem>>, vector<1x64xf32>
    %237 = vector.broadcast %236 : vector<1x64xf32> to vector<16x64xf32>
    %238 = arith.addf %235, %237 : vector<16x64xf32>
    %cst_66 = arith.constant 5.000000e-01 : f32
    %239 = vector.broadcast %cst_66 : f32 to vector<16x64xf32>
    %240 = arith.mulf %239, %238 : vector<16x64xf32>
    %cst_67 = arith.constant 0.707106769 : f32
    %241 = vector.broadcast %cst_67 : f32 to vector<16x64xf32>
    %242 = arith.mulf %238, %241 : vector<16x64xf32>
    %243 = math.erf %242 : vector<16x64xf32>
    %cst_68 = arith.constant 1.000000e+00 : f32
    %244 = vector.broadcast %cst_68 : f32 to vector<16x64xf32>
    %245 = arith.addf %244, %243 : vector<16x64xf32>
    %246 = arith.mulf %240, %245 : vector<16x64xf32>
    %c448 = arith.constant 448 : index
    %c0_69 = arith.constant 0 : index
    %247 = vector.load %arg2[%c448, %c0_69] : memref<544x128xbf16, #tpu.memory_space<vmem>>, vector<64x32xbf16>
    %248 = arith.truncf %246 : vector<16x64xf32> to vector<16x64xbf16>
    %cst_70 = arith.constant dense<0.000000e+00> : vector<16x32xf32>
    %249 = tpu.matmul %248, %247, %cst_70 {dimension_numbers = #tpu.dot_dimension_numbers<[1], [0], [0], [1], [0, 0, 1, 1], [], []>} : vector<16x64xbf16>, vector<64x32xbf16>, vector<16x32xf32> -> vector<16x32xf32>
    %c31 = arith.constant 31 : index
    %c0_71 = arith.constant 0 : index
    %250 = vector.load %arg3[%c31, %c0_71] : memref<35x128xf32, #tpu.memory_space<vmem>>, vector<1x32xf32>
    %251 = vector.broadcast %250 : vector<1x32xf32> to vector<16x32xf32>
    %252 = arith.addf %249, %251 : vector<16x32xf32>
    %253 = arith.addf %252, %210 : vector<16x32xf32>
    %254 = vector.extract_strided_slice %253 {offsets = [0, 0], sizes = [1, 32], strides = [1, 1]} : vector<16x32xf32> to vector<1x32xf32>
    %255 = vector.extract_strided_slice %253 {offsets = [8, 0], sizes = [1, 32], strides = [1, 1]} : vector<16x32xf32> to vector<1x32xf32>
    %256 = tpu.concatenate %254, %255 in 0 : vector<1x32xf32>, vector<1x32xf32> -> vector<2x32xf32>
    %c32 = arith.constant 32 : index
    %c0_72 = arith.constant 0 : index
    %257 = vector.load %arg3[%c32, %c0_72] : memref<35x128xf32, #tpu.memory_space<vmem>>, vector<1x32xf32>
    %c33 = arith.constant 33 : index
    %c0_73 = arith.constant 0 : index
    %258 = vector.load %arg3[%c33, %c0_73] : memref<35x128xf32, #tpu.memory_space<vmem>>, vector<1x32xf32>
    %cst_74 = arith.constant dense<0.000000e+00> : vector<2xf32>
    %259 = vector.multi_reduction <add>, %256, %cst_74 [1] : vector<2x32xf32> to vector<2xf32>
    %260 = vector.shape_cast %259 : vector<2xf32> to vector<2x1xf32>
    %cst_75 = arith.constant 3.200000e+01 : f32
    %261 = vector.broadcast %cst_75 : f32 to vector<2x1xf32>
    %262 = arith.divf %260, %261 : vector<2x1xf32>
    %263 = vector.broadcast %262 : vector<2x1xf32> to vector<2x32xf32>
    %264 = arith.subf %256, %263 : vector<2x32xf32>
    %265 = arith.mulf %264, %264 : vector<2x32xf32>
    %cst_76 = arith.constant dense<0.000000e+00> : vector<2xf32>
    %266 = vector.multi_reduction <add>, %265, %cst_76 [1] : vector<2x32xf32> to vector<2xf32>
    %267 = vector.shape_cast %266 : vector<2xf32> to vector<2x1xf32>
    %cst_77 = arith.constant 3.200000e+01 : f32
    %268 = vector.broadcast %cst_77 : f32 to vector<2x1xf32>
    %269 = arith.divf %267, %268 : vector<2x1xf32>
    %cst_78 = arith.constant 9.99999997E-7 : f32
    %270 = vector.broadcast %cst_78 : f32 to vector<2x1xf32>
    %271 = arith.addf %269, %270 : vector<2x1xf32>
    %272 = math.rsqrt %271 : vector<2x1xf32>
    %273 = vector.broadcast %272 : vector<2x1xf32> to vector<2x32xf32>
    %274 = arith.mulf %264, %273 : vector<2x32xf32>
    %275 = vector.broadcast %257 : vector<1x32xf32> to vector<2x32xf32>
    %276 = arith.mulf %274, %275 : vector<2x32xf32>
    %277 = vector.broadcast %258 : vector<1x32xf32> to vector<2x32xf32>
    %278 = arith.addf %276, %277 : vector<2x32xf32>
    %c512 = arith.constant 512 : index
    %c0_79 = arith.constant 0 : index
    %279 = vector.load %arg2[%c512, %c0_79] : memref<544x128xbf16, #tpu.memory_space<vmem>>, vector<32x64xbf16>
    %280 = arith.truncf %278 : vector<2x32xf32> to vector<2x32xbf16>
    %cst_80 = arith.constant dense<0.000000e+00> : vector<2x64xf32>
    %281 = tpu.matmul %280, %279, %cst_80 {dimension_numbers = #tpu.dot_dimension_numbers<[1], [0], [0], [1], [0, 0, 1, 1], [], []>} : vector<2x32xbf16>, vector<32x64xbf16>, vector<2x64xf32> -> vector<2x64xf32>
    %c0_81 = arith.constant 0 : index
    %c0_82 = arith.constant 0 : index
    %282 = vector.load %arg4[%c0_81, %c0_82] : memref<2x64xf32, #tpu.memory_space<vmem>>, vector<2x64xf32>
    tpu.vector_store %arg4[%c0_81, %c0_82], %281 {strides = array<i32>} : memref<2x64xf32, #tpu.memory_space<vmem>>, vector<2x64xf32>,
    return
  }
  func.func @transform_0(%arg0: i32) -> (i32, i32) {
    %c0_i32 = arith.constant 0 : i32
    %c0_i32_0 = arith.constant 0 : i32
    %c0_i32_1 = arith.constant 0 : i32
    return %c0_i32, %c0_i32_0 : i32, i32
  }
  func.func @transform_1(%arg0: i32) -> (i32, i32) {
    %c0_i32 = arith.constant 0 : i32
    %c0_i32_0 = arith.constant 0 : i32
    %c0_i32_1 = arith.constant 0 : i32
    return %c0_i32, %c0_i32_0 : i32, i32
  }
  func.func @transform_2(%arg0: i32) -> (i32, i32) {
    %c0_i32 = arith.constant 0 : i32
    %c0_i32_0 = arith.constant 0 : i32
    %c0_i32_1 = arith.constant 0 : i32
    return %c0_i32, %c0_i32_0 : i32, i32
  }
  func.func @transform_3(%arg0: i32) -> (i32, i32) {
    %c0_i32 = arith.constant 0 : i32
    %c0_i32_0 = arith.constant 0 : i32
    %c0_i32_1 = arith.constant 0 : i32
    return %c0_i32, %c0_i32_0 : i32, i32
  }
}

</mosaic_0001>

<llo_original>
// kernel: vit_age_forward.1
$region0: #{vit_age_forward.1}
  #allocation0 [shape = 'u32[]', space=smem, size = 0x4, offset = 0x4, fixed_abs, tag = 'smem constant byte address 0x4 - core index']
  #allocation1 [shape = 'u32[72,128]{1,0:T(1,128)}', space=vmem, size = 0x9000, scoped, tag = 'internal scratch']
  %s0 = inlined_call_operand.vmem [shape: bf16[16,192], index: 0, kind: input, shape index: {}]
  %s1 = inlined_call_operand.vmem [shape: bf16[544,128], index: 1, kind: input, shape index: {}]
  %s2 = inlined_call_operand.vmem [shape: f32[35,128], index: 2, kind: input, shape index: {}]
  %s3 = inlined_call_operand.hbm [shape: f32[2,64], index: 3, kind: output, shape index: {}]
  %s4 = sld [smem:[#allocation0]]
  $region22: #{vit_age_forward.1} parent=0
    _
  %s6 = ssub.s32 1, %s4
  %s7 = scalar_select 0, %s6, %s4
  $region1: #{vit_age_forward.1} parent=0
    #allocation2 [shape = 'u8[1024]{0}', space=vmem, size = 0x400, scoped, tag = 'output window, operand 0, single buffered']
    #allocation3 [shape = 's32[1]{0}', space=sflag, size = 0x4, scoped, tag = 'scoped memory for vit_age_forward.1']
    %8 = vsyncpa [#allocation3], 0
    // Predicated region
    $region2: #{vit_age_forward.1} parent=1 // pred_check
      _
    $region3: #{vit_age_forward.1} parent=1 // pred_check_branch
      %10 = sbr.rel (0) target = $region5
    $region4: #{vit_age_forward.1} parent=1 // pred_region
      _
    $region5: #{vit_age_forward.1} parent=1 // pred_fallthru
      _
    // Predicated region
    $region6: #{vit_age_forward.1} parent=1 // pred_check
      _
    $region7: #{vit_age_forward.1} parent=1 // pred_check_branch
      %12 = sbr.rel (0) target = $region9
    $region8: #{vit_age_forward.1} parent=1 // pred_region
      _
    $region9: #{vit_age_forward.1} parent=1 // pred_fallthru
      _
    // Predicated region
    $region10: #{vit_age_forward.1} parent=1 // pred_check
      _
    $region11: #{vit_age_forward.1} parent=1 // pred_check_branch
      %14 = sbr.rel (0) target = $region13
    $region12: #{vit_age_forward.1} parent=1 // pred_region
      _
    $region13: #{vit_age_forward.1} parent=1 // pred_fallthru
      _
    %v16 = vld [vmem:[%s0] sm:$0xff]
    %v17 = vld [vmem:[%s0 + $0x8] sm:$0xff]
    %v18 = vld [vmem:[%s1] sm:$0xf]
    %v19 = vld [vmem:[%s1 + $0x4] sm:$0xf]
    %v20 = vld [vmem:[%s1 + $0x8] sm:$0xf]
    %v21 = vld [vmem:[%s1 + $0xc] sm:$0xf]
    %v22 = vld [vmem:[%s1 + $0x10] sm:$0xf]
    %v23 = vld [vmem:[%s1 + $0x14] sm:$0xf]
    %v24 = vld [vmem:[%s1 + $0x18] sm:$0xf]
    %v25 = vld [vmem:[%s1 + $0x1c] sm:$0xf]
    %v26 = vld [vmem:[%s1 + $0x20] sm:$0xf]
    %v27 = vld [vmem:[%s1 + $0x24] sm:$0xf]
    %v28 = vld [vmem:[%s1 + $0x28] sm:$0xf]
    %v29 = vld [vmem:[%s1 + $0x2c] sm:$0xf]
    %v30 = vld [vmem:[%s1 + $0x30] sm:$0xf]
    %v31 = vld [vmem:[%s1 + $0x34] sm:$0xf]
    %v32 = vld [vmem:[%s1 + $0x38] sm:$0xf]
    %v33 = vld [vmem:[%s1 + $0x3c] sm:$0xf]
    %v34 = vld [vmem:[%s1 + $0x40] sm:$0xf]
    %v35 = vld [vmem:[%s1 + $0x44] sm:$0xf]
    %v36 = vld [vmem:[%s1 + $0x48] sm:$0xf]
    %v37 = vld [vmem:[%s1 + $0x4c] sm:$0xf]
    %v38 = vld [vmem:[%s1 + $0x50] sm:$0xf]
    %v39 = vld [vmem:[%s1 + $0x54] sm:$0xf]
    %v40 = vld [vmem:[%s1 + $0x58] sm:$0xf]
    %v41 = vld [vmem:[%s1 + $0x5c] sm:$0xf]
    %v42 = vld [vmem:[%s2] sm:$0xff]
    %v43 = vld [vmem:[%s2 + $0x8] sm:$0xff]
    %v46 = vunpack.c.l.b16 %v16
    %v47 = vunpack.c.h.b16 %v16
    %v48 = vunpack.c.l.b16 %v17
    %v49 = vunpack.c.h.b16 %v17
    %v50 = vpack.c.b16 %v48, %v46
    %v51 = vpack.c.b16 %v49, %v47
    %v77 = vunpack.c.l.b16 %v18
    %v78 = vunpack.c.l.b16 %v19
    %v79 = vunpack.c.l.b16 %v20
    %v80 = vunpack.c.l.b16 %v21
    %v81 = vunpack.c.l.b16 %v22
    %v82 = vunpack.c.l.b16 %v23
    %v83 = vunpack.c.l.b16 %v24
    %v84 = vunpack.c.l.b16 %v25
    %v85 = vunpack.c.l.b16 %v26
    %v86 = vunpack.c.l.b16 %v27
    %v87 = vunpack.c.l.b16 %v28
    %v88 = vunpack.c.l.b16 %v29
    %v89 = vunpack.c.l.b16 %v30
    %v90 = vunpack.c.l.b16 %v31
    %v91 = vunpack.c.l.b16 %v32
    %v92 = vunpack.c.l.b16 %v33
    %v93 = vunpack.c.l.b16 %v34
    %v94 = vunpack.c.l.b16 %v35
    %v95 = vunpack.c.l.b16 %v36
    %v96 = vunpack.c.l.b16 %v37
    %v97 = vunpack.c.l.b16 %v38
    %v98 = vunpack.c.l.b16 %v39
    %v99 = vunpack.c.l.b16 %v40
    %v100 = vunpack.c.l.b16 %v41
    %v101 = vpack.c.b16 %v78, %v77
    %v102 = vpack.c.b16 %v80, %v79
    %v103 = vpack.c.b16 %v82, %v81
    %v104 = vpack.c.b16 %v84, %v83
    %v105 = vpack.c.b16 %v86, %v85
    %v106 = vpack.c.b16 %v88, %v87
    %v107 = vpack.c.b16 %v90, %v89
    %v108 = vpack.c.b16 %v92, %v91
    %v109 = vpack.c.b16 %v94, %v93
    %v110 = vpack.c.b16 %v96, %v95
    %v111 = vpack.c.b16 %v98, %v97
    %v112 = vpack.c.b16 %v100, %v99
    %vm125 = vcmask 523264
    %v127 = vsel %vm125, %v51, 0
    %129 = vmatpush.bf16.msra.mxu0 %v108
    %130 = vmatpush.bf16.msra.mxu0 %v107
    %131 = vmatpush.bf16.msra.mxu0 %v106
    %132 = vmatpush.bf16.msra.mxu0 %v105
    %133 = vmatpush.bf16.msra.mxu0 %v104
    %134 = vmatpush.bf16.msra.mxu0 %v103
    %135 = vmatpush.bf16.msra.mxu0 %v102
    %136 = vmatpush.bf16.msra.mxu0 %v101
    %137 = vmatmul.bf16.gmra.mxu0 %v50
    %v138 = vpop.f32.mrf.mxu0
    %v139 = vadd.f32 %v42, %v138
    %v140 = vpop.f32.mrf.mxu0
    %v141 = vadd.f32 %v43, %v140
    %142 = vdwg.mxu0
    %143 = vmatpush.bf16.msra.mxu0 0
    %144 = vmatpush.bf16.msra.mxu0 0
    %145 = vmatpush.bf16.msra.mxu0 0
    %146 = vmatpush.bf16.msra.mxu0 0
    %147 = vmatpush.bf16.msra.mxu0 %v112
    %148 = vmatpush.bf16.msra.mxu0 %v111
    %149 = vmatpush.bf16.msra.mxu0 %v110
    %150 = vmatpush.bf16.msra.mxu0 %v109
    %151 = vmatmul.bf16.gmra.mxu0 %v127
    %v152 = vpop.f32.mrf.mxu0
    %v153 = vadd.f32 %v139, %v152
    %v154 = vpop.f32.mrf.mxu0
    %v155 = vadd.f32 %v141, %v154
    %156 = vdwg.mxu0
    %v157 = vld [vmem:[%s2 + $0x22] sm:$0x1]
    %v158 = vld [vmem:[%s2 + $0x10] sm:$0x1]
    %v159 = vld [vmem:[%s2 + $0x11] sm:$0x1]
    %vm160 = vcmask 261120
    %v161 = vsel %vm160, %v153, 0.0
    %162 = vadd.xlane.f32.xlu0 %v161
    %v163 = vpop.xlane.xlu0 %162
    %v164 = vsel %vm160, %v155, 0.0
    %165 = vadd.xlane.f32.xlu0 %v164
    %v166 = vpop.xlane.xlu0 %165
    %v167 = vrcp.pop 32.0
    %v168 = vmul.f32 32.0, %v167
    %v169 = vsub.f32 1.0, %v168
    %v170 = vmul.f32 %v167, %v169
    %v171 = vadd.f32 %v167, %v170
    %vm172 = vweird.f32 %v167
    %v173 = vsel %vm172, %v167, %v171
    %v174 = vmul.f32 %v163, %v173
    %v175 = vmul.f32 %v166, %v173
    %v176 = vsub.f32 %v153, %v174
    %v177 = vsub.f32 %v155, %v175
    %v178 = vmul.f32 %v176, %v176
    %v179 = vmul.f32 %v177, %v177
    %v180 = vsel %vm160, %v178, 0.0
    %181 = vadd.xlane.f32.xlu0 %v180
    %v182 = vpop.xlane.xlu0 %181
    %v183 = vsel %vm160, %v179, 0.0
    %184 = vadd.xlane.f32.xlu0 %v183
    %v185 = vpop.xlane.xlu0 %184
    %v186 = vmul.f32 %v182, %v173
    %v187 = vmul.f32 %v185, %v173
    %v188 = vadd.f32 %v186, 1e-06
    %v189 = vadd.f32 %v187, 1e-06
    %v190 = vrsqrt.pop %v188
    %v191 = vmul.f32 %v190, %v188
    %v192 = vmul.f32 %v191, %v190
    %v193 = vmul.f32 0.5, %v192
    %v194 = vsub.f32 1.5, %v193
    %v195 = vmul.f32 %v190, %v194
    %vm196 = vweird.f32 %v188
    %vm197 = vweird.f32 %v190
    %vm198 = vmor %vm196, %vm197
    %v199 = vsel %vm198, %v190, %v195
    %v200 = vrsqrt.pop %v189
    %v201 = vmul.f32 %v200, %v189
    %v202 = vmul.f32 %v201, %v200
    %v203 = vmul.f32 0.5, %v202
    %v204 = vsub.f32 1.5, %v203
    %v205 = vmul.f32 %v200, %v204
    %vm206 = vweird.f32 %v189
    %vm207 = vweird.f32 %v200
    %vm208 = vmor %vm206, %vm207
    %v209 = vsel %vm208, %v200, %v205
    %v210 = vmul.f32 %v176, %v199
    %v211 = vmul.f32 %v177, %v209
    %v212 = vperm.slane %v158, 0
    %v213 = vmul.f32 %v210, %v212
    %v214 = vmul.f32 %v211, %v212
    %v215 = vperm.slane %v159, 0
    %v216 = vadd.f32 %v213, %v215
    %v217 = vadd.f32 %v214, %v215
    %v218 = vld [vmem:[%s1 + $0x60] sm:$0xf]
    %v219 = vld [vmem:[%s1 + $0x64] sm:$0xf]
    %v220 = vld [vmem:[%s1 + $0x68] sm:$0xf]
    %v221 = vld [vmem:[%s1 + $0x6c] sm:$0xf]
    %v222 = vpack.c.bf16 %v217, %v216
    %v223 = vld [vmem:[%s2 + $0x12] sm:$0x1]
    %v224 = vperm.slane %v223, 0
    %v229 = vunpack.c.l.b16 %v218
    %v230 = vunpack.c.l.b16 %v219
    %v231 = vunpack.c.l.b16 %v220
    %v232 = vunpack.c.l.b16 %v221
    %v233 = vpack.c.b16 %v230, %v229
    %v234 = vpack.c.b16 %v232, %v231
    %v238 = vsel %vm160, %v222, 0
    %240 = vmatpush.bf16.msra.mxu0 0
    %241 = vmatpush.bf16.msra.mxu0 0
    %242 = vmatpush.bf16.msra.mxu0 0
    %243 = vmatpush.bf16.msra.mxu0 0
    %244 = vmatpush.bf16.msra.mxu0 0
    %245 = vmatpush.bf16.msra.mxu0 0
    %246 = vmatpush.bf16.msra.mxu0 %v234
    %247 = vmatpush.bf16.msra.mxu0 %v233
    %248 = vmatmul.bf16.gmra.mxu0 %v238
    %v249 = vpop.f32.mrf.mxu0
    %v250 = vadd.f32 %v224, %v249
    %v251 = vpop.f32.mrf.mxu0
    %v252 = vadd.f32 %v224, %v251
    %253 = vdwg.mxu0
    %256 = vrot.lane.b32.xlu0 %v250, 120
    %v257 = vpop.permute.xlu0 %256
    %258 = vrot.lane.b32.xlu0 %v252, 120
    %v259 = vpop.permute.xlu0 %258
    %262 = vrot.lane.b32.xlu0 %v250, 112
    %v263 = vpop.permute.xlu0 %262
    %264 = vrot.lane.b32.xlu0 %v252, 112
    %v265 = vpop.permute.xlu0 %264
    %268 = vrot.lane.b32.xlu0 %v250, 104
    %v269 = vpop.permute.xlu0 %268
    %270 = vrot.lane.b32.xlu0 %v252, 104
    %v271 = vpop.permute.xlu0 %270
    %v274 = vpack.c.bf16 %v250, %v250
    %v275 = vpack.c.bf16 %v252, %v252
    %v276 = vpack.c.bf16 %v257, %v257
    %v277 = vpack.c.bf16 %v259, %v259
    %v278 = vpack.c.bf16 %v263, %v263
    %v279 = vpack.c.bf16 %v265, %v265
    %v280 = vpack.c.bf16 %v269, %v269
    %v281 = vpack.c.bf16 %v271, %v271
    %v282 = vperm.slane %v157, 0
    %v284 = vunpack.c.l.b16 %v274
    %v285 = vpack.c.b16 %v284, %v284
    %286 = vrot.lane.b32.xlu0 %v285, 96
    %v287 = vpop.permute.xlu0 %286
    %vm288 = vcmask 64512
    %v290 = vsel %vm288, %v274, 0
    %v293 = vsel %vm288, %v287, 0
    %295 = vmatpush.bf16.xpose.msra.mxu0 0
    %296 = vmatpush.bf16.xpose.msra.mxu0 0
    %297 = vmatpush.bf16.xpose.msra.mxu0 0
    %298 = vmatpush.bf16.xpose.msra.mxu0 0
    %299 = vmatpush.bf16.xpose.msra.mxu0 0
    %300 = vmatpush.bf16.xpose.msra.mxu0 0
    %301 = vmatpush.bf16.xpose.msra.mxu0 0
    %302 = vmatpush.bf16.xpose.msra.mxu0 %v293
    %303 = vmatmul.bf16.gmra.mxu0 %v290
    %v304 = vpop.f32.mrf.mxu0
    %v305 = vadd.f32 %v282, %v304
    %v306 = vpop.f32.mrf.mxu0
    %307 = vdwg.mxu0
    %v309 = vunpack.c.l.b16 %v275
    %v310 = vpack.c.b16 %v309, %v309
    %311 = vrot.lane.b32.xlu0 %v310, 96
    %v312 = vpop.permute.xlu0 %311
    %v314 = vsel %vm288, %v275, 0
    %v317 = vsel %vm288, %v312, 0
    %319 = vmatpush.bf16.xpose.msra.mxu0 0
    %320 = vmatpush.bf16.xpose.msra.mxu0 0
    %321 = vmatpush.bf16.xpose.msra.mxu0 0
    %322 = vmatpush.bf16.xpose.msra.mxu0 0
    %323 = vmatpush.bf16.xpose.msra.mxu0 0
    %324 = vmatpush.bf16.xpose.msra.mxu0 0
    %325 = vmatpush.bf16.xpose.msra.mxu0 0
    %326 = vmatpush.bf16.xpose.msra.mxu0 %v317
    %327 = vmatmul.bf16.gmra.mxu0 %v314
    %v328 = vpop.f32.mrf.mxu0
    %v329 = vadd.f32 %v282, %v328
    %v330 = vpop.f32.mrf.mxu0
    %331 = vdwg.mxu0
    %v333 = vunpack.c.l.b16 %v276
    %v334 = vpack.c.b16 %v333, %v333
    %335 = vrot.lane.b32.xlu0 %v334, 96
    %v336 = vpop.permute.xlu0 %335
    %v338 = vsel %vm288, %v276, 0
    %v341 = vsel %vm288, %v336, 0
    %343 = vmatpush.bf16.xpose.msra.mxu0 0
    %344 = vmatpush.bf16.xpose.msra.mxu0 0
    %345 = vmatpush.bf16.xpose.msra.mxu0 0
    %346 = vmatpush.bf16.xpose.msra.mxu0 0
    %347 = vmatpush.bf16.xpose.msra.mxu0 0
    %348 = vmatpush.bf16.xpose.msra.mxu0 0
    %349 = vmatpush.bf16.xpose.msra.mxu0 0
    %350 = vmatpush.bf16.xpose.msra.mxu0 %v341
    %351 = vmatmul.bf16.gmra.mxu0 %v338
    %v352 = vpop.f32.mrf.mxu0
    %v353 = vadd.f32 %v282, %v352
    %v354 = vpop.f32.mrf.mxu0
    %355 = vdwg.mxu0
    %v357 = vunpack.c.l.b16 %v277
    %v358 = vpack.c.b16 %v357, %v357
    %359 = vrot.lane.b32.xlu0 %v358, 96
    %v360 = vpop.permute.xlu0 %359
    %v362 = vsel %vm288, %v277, 0
    %v365 = vsel %vm288, %v360, 0
    %367 = vmatpush.bf16.xpose.msra.mxu0 0
    %368 = vmatpush.bf16.xpose.msra.mxu0 0
    %369 = vmatpush.bf16.xpose.msra.mxu0 0
    %370 = vmatpush.bf16.xpose.msra.mxu0 0
    %371 = vmatpush.bf16.xpose.msra.mxu0 0
    %372 = vmatpush.bf16.xpose.msra.mxu0 0
    %373 = vmatpush.bf16.xpose.msra.mxu0 0
    %374 = vmatpush.bf16.xpose.msra.mxu0 %v365
    %375 = vmatmul.bf16.gmra.mxu0 %v362
    %v376 = vpop.f32.mrf.mxu0
    %v377 = vadd.f32 %v282, %v376
    %v378 = vpop.f32.mrf.mxu0
    %379 = vdwg.mxu0
    %v381 = vunpack.c.l.b16 %v278
    %v382 = vpack.c.b16 %v381, %v381
    %383 = vrot.lane.b32.xlu0 %v382, 96
    %v384 = vpop.permute.xlu0 %383
    %v386 = vsel %vm288, %v278, 0
    %v389 = vsel %vm288, %v384, 0
    %391 = vmatpush.bf16.xpose.msra.mxu0 0
    %392 = vmatpush.bf16.xpose.msra.mxu0 0
    %393 = vmatpush.bf16.xpose.msra.mxu0 0
    %394 = vmatpush.bf16.xpose.msra.mxu0 0
    %395 = vmatpush.bf16.xpose.msra.mxu0 0
    %396 = vmatpush.bf16.xpose.msra.mxu0 0
    %397 = vmatpush.bf16.xpose.msra.mxu0 0
    %398 = vmatpush.bf16.xpose.msra.mxu0 %v389
    %399 = vmatmul.bf16.gmra.mxu0 %v386
    %v400 = vpop.f32.mrf.mxu0
    %v401 = vadd.f32 %v282, %v400
    %v402 = vpop.f32.mrf.mxu0
    %403 = vdwg.mxu0
    %v405 = vunpack.c.l.b16 %v279
    %v406 = vpack.c.b16 %v405, %v405
    %407 = vrot.lane.b32.xlu0 %v406, 96
    %v408 = vpop.permute.xlu0 %407
    %v410 = vsel %vm288, %v279, 0
    %v413 = vsel %vm288, %v408, 0
    %415 = vmatpush.bf16.xpose.msra.mxu0 0
    %416 = vmatpush.bf16.xpose.msra.mxu0 0
    %417 = vmatpush.bf16.xpose.msra.mxu0 0
    %418 = vmatpush.bf16.xpose.msra.mxu0 0
    %419 = vmatpush.bf16.xpose.msra.mxu0 0
    %420 = vmatpush.bf16.xpose.msra.mxu0 0
    %421 = vmatpush.bf16.xpose.msra.mxu0 0
    %422 = vmatpush.bf16.xpose.msra.mxu0 %v413
    %423 = vmatmul.bf16.gmra.mxu0 %v410
    %v424 = vpop.f32.mrf.mxu0
    %v425 = vadd.f32 %v282, %v424
    %v426 = vpop.f32.mrf.mxu0
    %427 = vdwg.mxu0
    %v429 = vunpack.c.l.b16 %v280
    %v430 = vpack.c.b16 %v429, %v429
    %431 = vrot.lane.b32.xlu0 %v430, 96
    %v432 = vpop.permute.xlu0 %431
    %v434 = vsel %vm288, %v280, 0
    %v437 = vsel %vm288, %v432, 0
    %439 = vmatpush.bf16.xpose.msra.mxu0 0
    %440 = vmatpush.bf16.xpose.msra.mxu0 0
    %441 = vmatpush.bf16.xpose.msra.mxu0 0
    %442 = vmatpush.bf16.xpose.msra.mxu0 0
    %443 = vmatpush.bf16.xpose.msra.mxu0 0
    %444 = vmatpush.bf16.xpose.msra.mxu0 0
    %445 = vmatpush.bf16.xpose.msra.mxu0 0
    %446 = vmatpush.bf16.xpose.msra.mxu0 %v437
    %447 = vmatmul.bf16.gmra.mxu0 %v434
    %v448 = vpop.f32.mrf.mxu0
    %v449 = vadd.f32 %v282, %v448
    %v450 = vpop.f32.mrf.mxu0
    %451 = vdwg.mxu0
    %v453 = vunpack.c.l.b16 %v281
    %v454 = vpack.c.b16 %v453, %v453
    %455 = vrot.lane.b32.xlu0 %v454, 96
    %v456 = vpop.permute.xlu0 %455
    %v458 = vsel %vm288, %v281, 0
    %v461 = vsel %vm288, %v456, 0
    %463 = vmatpush.bf16.xpose.msra.mxu0 0
    %464 = vmatpush.bf16.xpose.msra.mxu0 0
    %465 = vmatpush.bf16.xpose.msra.mxu0 0
    %466 = vmatpush.bf16.xpose.msra.mxu0 0
    %467 = vmatpush.bf16.xpose.msra.mxu0 0
    %468 = vmatpush.bf16.xpose.msra.mxu0 0
    %469 = vmatpush.bf16.xpose.msra.mxu0 0
    %470 = vmatpush.bf16.xpose.msra.mxu0 %v461
    %471 = vmatmul.bf16.gmra.mxu0 %v458
    %v472 = vpop.f32.mrf.mxu0
    %v473 = vadd.f32 %v282, %v472
    %v474 = vpop.f32.mrf.mxu0
    %475 = vdwg.mxu0
    %v476 = vsel %vm288, %v305, -inf
    %477 = vmax.xlane.f32.xlu0 %v476
    %v478 = vpop.xlane.xlu0 %477
    %v479 = vsel %vm288, %v329, -inf
    %480 = vmax.xlane.f32.xlu0 %v479
    %v481 = vpop.xlane.xlu0 %480
    %v482 = vsel %vm288, %v353, -inf
    %483 = vmax.xlane.f32.xlu0 %v482
    %v484 = vpop.xlane.xlu0 %483
    %v485 = vsel %vm288, %v377, -inf
    %486 = vmax.xlane.f32.xlu0 %v485
    %v487 = vpop.xlane.xlu0 %486
    %v488 = vsel %vm288, %v401, -inf
    %489 = vmax.xlane.f32.xlu0 %v488
    %v490 = vpop.xlane.xlu0 %489
    %v491 = vsel %vm288, %v425, -inf
    %492 = vmax.xlane.f32.xlu0 %v491
    %v493 = vpop.xlane.xlu0 %492
    %v494 = vsel %vm288, %v449, -inf
    %495 = vmax.xlane.f32.xlu0 %v494
    %v496 = vpop.xlane.xlu0 %495
    %v497 = vsel %vm288, %v473, -inf
    %498 = vmax.xlane.f32.xlu0 %v497
    %v499 = vpop.xlane.xlu0 %498
    %v500 = vsub.f32 %v305, %v478
    %v501 = vsub.f32 %v329, %v481
    %v502 = vsub.f32 %v353, %v484
    %v503 = vsub.f32 %v377, %v487
    %v504 = vsub.f32 %v401, %v490
    %v505 = vsub.f32 %v425, %v493
    %v506 = vsub.f32 %v449, %v496
    %v507 = vsub.f32 %v473, %v499
    %v508 = vmul.f32 %v500, 1.442695
    %v509 = vpow.pop %v508
    %v510 = vmul.f32 %v501, 1.442695
    %v511 = vpow.pop %v510
    %v512 = vmul.f32 %v502, 1.442695
    %v513 = vpow.pop %v512
    %v514 = vmul.f32 %v503, 1.442695
    %v515 = vpow.pop %v514
    %v516 = vmul.f32 %v504, 1.442695
    %v517 = vpow.pop %v516
    %v518 = vmul.f32 %v505, 1.442695
    %v519 = vpow.pop %v518
    %v520 = vmul.f32 %v506, 1.442695
    %v521 = vpow.pop %v520
    %v522 = vmul.f32 %v507, 1.442695
    %v523 = vpow.pop %v522
    %v524 = vsel %vm288, %v509, 0.0
    %525 = vadd.xlane.f32.xlu0 %v524
    %v526 = vpop.xlane.xlu0 %525
    %v527 = vsel %vm288, %v511, 0.0
    %528 = vadd.xlane.f32.xlu0 %v527
    %v529 = vpop.xlane.xlu0 %528
    %v530 = vsel %vm288, %v513, 0.0
    %531 = vadd.xlane.f32.xlu0 %v530
    %v532 = vpop.xlane.xlu0 %531
    %v533 = vsel %vm288, %v515, 0.0
    %534 = vadd.xlane.f32.xlu0 %v533
    %v535 = vpop.xlane.xlu0 %534
    %v536 = vsel %vm288, %v517, 0.0
    %537 = vadd.xlane.f32.xlu0 %v536
    %v538 = vpop.xlane.xlu0 %537
    %v539 = vsel %vm288, %v519, 0.0
    %540 = vadd.xlane.f32.xlu0 %v539
    %v541 = vpop.xlane.xlu0 %540
    %v542 = vsel %vm288, %v521, 0.0
    %543 = vadd.xlane.f32.xlu0 %v542
    %v544 = vpop.xlane.xlu0 %543
    %v545 = vsel %vm288, %v523, 0.0
    %546 = vadd.xlane.f32.xlu0 %v545
    %v547 = vpop.xlane.xlu0 %546
    %v548 = vrcp.pop %v526
    %v549 = vrcp.pop %v529
    %v550 = vrcp.pop %v532
    %v551 = vrcp.pop %v535
    %v552 = vrcp.pop %v538
    %v553 = vrcp.pop %v541
    %v554 = vrcp.pop %v544
    %v555 = vrcp.pop %v547
    %v556 = vmul.f32 %v509, %v548
    %v557 = vmul.f32 %v511, %v549
    %v558 = vmul.f32 %v513, %v550
    %v559 = vmul.f32 %v515, %v551
    %v560 = vmul.f32 %v517, %v552
    %v561 = vmul.f32 %v519, %v553
    %v562 = vmul.f32 %v521, %v554
    %v563 = vmul.f32 %v523, %v555
    %v564 = vpack.c.bf16 %v556, %v556
    %v565 = vpack.c.bf16 %v557, %v557
    %v566 = vpack.c.bf16 %v558, %v558
    %v567 = vpack.c.bf16 %v559, %v559
    %v568 = vpack.c.bf16 %v560, %v560
    %v569 = vpack.c.bf16 %v561, %v561
    %v570 = vpack.c.bf16 %v562, %v562
    %v571 = vpack.c.bf16 %v563, %v563
    %572 = vrot.lane.b32.xlu0 %v285, 64
    %v573 = vpop.permute.xlu0 %572
    %v575 = vsel %vm288, %v564, 0
    %vm577 = vcmask 1043456
    %v579 = vsel %vm577, %v573, 0
    %581 = vmatpush.bf16.msra.mxu0 0
    %582 = vmatpush.bf16.msra.mxu0 0
    %583 = vmatpush.bf16.msra.mxu0 0
    %584 = vmatpush.bf16.msra.mxu0 0
    %585 = vmatpush.bf16.msra.mxu0 0
    %586 = vmatpush.bf16.msra.mxu0 0
    %587 = vmatpush.bf16.msra.mxu0 0
    %588 = vmatpush.bf16.msra.mxu0 %v579
    %589 = vmatmul.bf16.gmra.mxu0 %v575
    %v590 = vpop.f32.mrf.mxu0
    %v591 = vadd.f32 0.0, %v590
    %v592 = vpop.f32.mrf.mxu0
    %593 = vdwg.mxu0
    %594 = vrot.lane.b32.xlu0 %v310, 64
    %v595 = vpop.permute.xlu0 %594
    %v597 = vsel %vm288, %v565, 0
    %v600 = vsel %vm577, %v595, 0
    %602 = vmatpush.bf16.msra.mxu0 0
    %603 = vmatpush.bf16.msra.mxu0 0
    %604 = vmatpush.bf16.msra.mxu0 0
    %605 = vmatpush.bf16.msra.mxu0 0
    %606 = vmatpush.bf16.msra.mxu0 0
    %607 = vmatpush.bf16.msra.mxu0 0
    %608 = vmatpush.bf16.msra.mxu0 0
    %609 = vmatpush.bf16.msra.mxu0 %v600
    %610 = vmatmul.bf16.gmra.mxu0 %v597
    %v611 = vpop.f32.mrf.mxu0
    %v612 = vadd.f32 0.0, %v611
    %v613 = vpop.f32.mrf.mxu0
    %614 = vdwg.mxu0
    %615 = vrot.lane.b32.xlu0 %v334, 64
    %v616 = vpop.permute.xlu0 %615
    %v618 = vsel %vm288, %v566, 0
    %v621 = vsel %vm577, %v616, 0
    %623 = vmatpush.bf16.msra.mxu0 0
    %624 = vmatpush.bf16.msra.mxu0 0
    %625 = vmatpush.bf16.msra.mxu0 0
    %626 = vmatpush.bf16.msra.mxu0 0
    %627 = vmatpush.bf16.msra.mxu0 0
    %628 = vmatpush.bf16.msra.mxu0 0
    %629 = vmatpush.bf16.msra.mxu0 0
    %630 = vmatpush.bf16.msra.mxu0 %v621
    %631 = vmatmul.bf16.gmra.mxu0 %v618
    %v632 = vpop.f32.mrf.mxu0
    %v633 = vadd.f32 0.0, %v632
    %v634 = vpop.f32.mrf.mxu0
    %635 = vdwg.mxu0
    %636 = vrot.lane.b32.xlu0 %v358, 64
    %v637 = vpop.permute.xlu0 %636
    %v639 = vsel %vm288, %v567, 0
    %v642 = vsel %vm577, %v637, 0
    %644 = vmatpush.bf16.msra.mxu0 0
    %645 = vmatpush.bf16.msra.mxu0 0
    %646 = vmatpush.bf16.msra.mxu0 0
    %647 = vmatpush.bf16.msra.mxu0 0
    %648 = vmatpush.bf16.msra.mxu0 0
    %649 = vmatpush.bf16.msra.mxu0 0
    %650 = vmatpush.bf16.msra.mxu0 0
    %651 = vmatpush.bf16.msra.mxu0 %v642
    %652 = vmatmul.bf16.gmra.mxu0 %v639
    %v653 = vpop.f32.mrf.mxu0
    %v654 = vadd.f32 0.0, %v653
    %v655 = vpop.f32.mrf.mxu0
    %656 = vdwg.mxu0
    %657 = vrot.lane.b32.xlu0 %v382, 64
    %v658 = vpop.permute.xlu0 %657
    %v660 = vsel %vm288, %v568, 0
    %v663 = vsel %vm577, %v658, 0
    %665 = vmatpush.bf16.msra.mxu0 0
    %666 = vmatpush.bf16.msra.mxu0 0
    %667 = vmatpush.bf16.msra.mxu0 0
    %668 = vmatpush.bf16.msra.mxu0 0
    %669 = vmatpush.bf16.msra.mxu0 0
    %670 = vmatpush.bf16.msra.mxu0 0
    %671 = vmatpush.bf16.msra.mxu0 0
    %672 = vmatpush.bf16.msra.mxu0 %v663
    %673 = vmatmul.bf16.gmra.mxu0 %v660
    %v674 = vpop.f32.mrf.mxu0
    %v675 = vadd.f32 0.0, %v674
    %v676 = vpop.f32.mrf.mxu0
    %677 = vdwg.mxu0
    %678 = vrot.lane.b32.xlu0 %v406, 64
    %v679 = vpop.permute.xlu0 %678
    %v681 = vsel %vm288, %v569, 0
    %v684 = vsel %vm577, %v679, 0
    %686 = vmatpush.bf16.msra.mxu0 0
    %687 = vmatpush.bf16.msra.mxu0 0
    %688 = vmatpush.bf16.msra.mxu0 0
    %689 = vmatpush.bf16.msra.mxu0 0
    %690 = vmatpush.bf16.msra.mxu0 0
    %691 = vmatpush.bf16.msra.mxu0 0
    %692 = vmatpush.bf16.msra.mxu0 0
    %693 = vmatpush.bf16.msra.mxu0 %v684
    %694 = vmatmul.bf16.gmra.mxu0 %v681
    %v695 = vpop.f32.mrf.mxu0
    %v696 = vadd.f32 0.0, %v695
    %v697 = vpop.f32.mrf.mxu0
    %698 = vdwg.mxu0
    %699 = vrot.lane.b32.xlu0 %v430, 64
    %v700 = vpop.permute.xlu0 %699
    %v702 = vsel %vm288, %v570, 0
    %v705 = vsel %vm577, %v700, 0
    %707 = vmatpush.bf16.msra.mxu0 0
    %708 = vmatpush.bf16.msra.mxu0 0
    %709 = vmatpush.bf16.msra.mxu0 0
    %710 = vmatpush.bf16.msra.mxu0 0
    %711 = vmatpush.bf16.msra.mxu0 0
    %712 = vmatpush.bf16.msra.mxu0 0
    %713 = vmatpush.bf16.msra.mxu0 0
    %714 = vmatpush.bf16.msra.mxu0 %v705
    %715 = vmatmul.bf16.gmra.mxu0 %v702
    %v716 = vpop.f32.mrf.mxu0
    %v717 = vadd.f32 0.0, %v716
    %v718 = vpop.f32.mrf.mxu0
    %719 = vdwg.mxu0
    %720 = vrot.lane.b32.xlu0 %v454, 64
    %v721 = vpop.permute.xlu0 %720
    %v723 = vsel %vm288, %v571, 0
    %v726 = vsel %vm577, %v721, 0
    %728 = vmatpush.bf16.msra.mxu0 0
    %729 = vmatpush.bf16.msra.mxu0 0
    %730 = vmatpush.bf16.msra.mxu0 0
    %731 = vmatpush.bf16.msra.mxu0 0
    %732 = vmatpush.bf16.msra.mxu0 0
    %733 = vmatpush.bf16.msra.mxu0 0
    %734 = vmatpush.bf16.msra.mxu0 0
    %735 = vmatpush.bf16.msra.mxu0 %v726
    %736 = vmatmul.bf16.gmra.mxu0 %v723
    %v737 = vpop.f32.mrf.mxu0
    %v738 = vadd.f32 0.0, %v737
    %v739 = vpop.f32.mrf.mxu0
    %740 = vdwg.mxu0
    %743 = vrot.lane.b32.xlu0 %v633, 8
    %v744 = vpop.permute.xlu0 %743
    %745 = vrot.lane.b32.xlu0 %v654, 8
    %v746 = vpop.permute.xlu0 %745
    %751 = vrot.lane.b32.xlu0 %v675, 16
    %v752 = vpop.permute.xlu0 %751
    %753 = vrot.lane.b32.xlu0 %v696, 16
    %v754 = vpop.permute.xlu0 %753
    %759 = vrot.lane.b32.xlu0 %v717, 24
    %v760 = vpop.permute.xlu0 %759
    %761 = vrot.lane.b32.xlu0 %v738, 24
    %v762 = vpop.permute.xlu0 %761
    %v765 = vsel %vm288, %v591, %v744
    %v766 = vsel %vm288, %v612, %v746
    %vm767 = vcmask 130048
    %v768 = vsel %vm767, %v765, %v752
    %v769 = vsel %vm767, %v766, %v754
    %vm770 = vcmask 195584
    %v771 = vsel %vm770, %v768, %v760
    %v772 = vsel %vm770, %v769, %v762
    %v773 = vld [vmem:[%s1 + $0x70] sm:$0xf]
    %v774 = vld [vmem:[%s1 + $0x74] sm:$0xf]
    %v775 = vld [vmem:[%s1 + $0x78] sm:$0xf]
    %v776 = vld [vmem:[%s1 + $0x7c] sm:$0xf]
    %v777 = vpack.c.bf16 %v772, %v771
    %v778 = vld [vmem:[%s2 + $0x13] sm:$0x1]
    %v779 = vperm.slane %v778, 0
    %v784 = vunpack.c.l.b16 %v773
    %v785 = vunpack.c.l.b16 %v774
    %v786 = vunpack.c.l.b16 %v775
    %v787 = vunpack.c.l.b16 %v776
    %v788 = vpack.c.b16 %v785, %v784
    %v789 = vpack.c.b16 %v787, %v786
    %v793 = vsel %vm160, %v777, 0
    %795 = vmatpush.bf16.msra.mxu0 0
    %796 = vmatpush.bf16.msra.mxu0 0
    %797 = vmatpush.bf16.msra.mxu0 0
    %798 = vmatpush.bf16.msra.mxu0 0
    %799 = vmatpush.bf16.msra.mxu0 0
    %800 = vmatpush.bf16.msra.mxu0 0
    %801 = vmatpush.bf16.msra.mxu0 %v789
    %802 = vmatpush.bf16.msra.mxu0 %v788
    %803 = vmatmul.bf16.gmra.mxu0 %v793
    %v804 = vpop.f32.mrf.mxu0
    %v805 = vadd.f32 %v779, %v804
    %v806 = vpop.f32.mrf.mxu0
    %v807 = vadd.f32 %v779, %v806
    %808 = vdwg.mxu0
    %v809 = vadd.f32 %v805, %v153
    %v810 = vadd.f32 %v807, %v155
    %v811 = vld [vmem:[%s2 + $0x14] sm:$0x1]
    %v812 = vld [vmem:[%s2 + $0x15] sm:$0x1]
    %v813 = vsel %vm160, %v809, 0.0
    %814 = vadd.xlane.f32.xlu0 %v813
    %v815 = vpop.xlane.xlu0 %814
    %v816 = vsel %vm160, %v810, 0.0
    %817 = vadd.xlane.f32.xlu0 %v816
    %v818 = vpop.xlane.xlu0 %817
    %v819 = vmul.f32 %v815, %v173
    %v820 = vmul.f32 %v818, %v173
    %v821 = vsub.f32 %v809, %v819
    %v822 = vsub.f32 %v810, %v820
    %v823 = vmul.f32 %v821, %v821
    %v824 = vmul.f32 %v822, %v822
    %v825 = vsel %vm160, %v823, 0.0
    %826 = vadd.xlane.f32.xlu0 %v825
    %v827 = vpop.xlane.xlu0 %826
    %v828 = vsel %vm160, %v824, 0.0
    %829 = vadd.xlane.f32.xlu0 %v828
    %v830 = vpop.xlane.xlu0 %829
    %v831 = vmul.f32 %v827, %v173
    %v832 = vmul.f32 %v830, %v173
    %v833 = vadd.f32 %v831, 1e-06
    %v834 = vadd.f32 %v832, 1e-06
    %v835 = vrsqrt.pop %v833
    %v836 = vmul.f32 %v835, %v833
    %v837 = vmul.f32 %v836, %v835
    %v838 = vmul.f32 0.5, %v837
    %v839 = vsub.f32 1.5, %v838
    %v840 = vmul.f32 %v835, %v839
    %vm841 = vweird.f32 %v833
    %vm842 = vweird.f32 %v835
    %vm843 = vmor %vm841, %vm842
    %v844 = vsel %vm843, %v835, %v840
    %v845 = vrsqrt.pop %v834
    %v846 = vmul.f32 %v845, %v834
    %v847 = vmul.f32 %v846, %v845
    %v848 = vmul.f32 0.5, %v847
    %v849 = vsub.f32 1.5, %v848
    %v850 = vmul.f32 %v845, %v849
    %vm851 = vweird.f32 %v834
    %vm852 = vweird.f32 %v845
    %vm853 = vmor %vm851, %vm852
    %v854 = vsel %vm853, %v845, %v850
    %v855 = vmul.f32 %v821, %v844
    %v856 = vmul.f32 %v822, %v854
    %v857 = vperm.slane %v811, 0
    %v858 = vmul.f32 %v855, %v857
    %v859 = vmul.f32 %v856, %v857
    %v860 = vperm.slane %v812, 0
    %v861 = vadd.f32 %v858, %v860
    %v862 = vadd.f32 %v859, %v860
    %v863 = vld [vmem:[%s1 + $0x80] sm:$0xf]
    %v864 = vld [vmem:[%s1 + $0x84] sm:$0xf]
    %v865 = vld [vmem:[%s1 + $0x88] sm:$0xf]
    %v866 = vld [vmem:[%s1 + $0x8c] sm:$0xf]
    %v867 = vpack.c.bf16 %v862, %v861
    %v868 = vld [vmem:[%s2 + $0x16] sm:$0x1]
    %v869 = vperm.slane %v868, 0
    %v874 = vunpack.c.l.b16 %v863
    %v875 = vunpack.c.l.b16 %v864
    %v876 = vunpack.c.l.b16 %v865
    %v877 = vunpack.c.l.b16 %v866
    %v878 = vpack.c.b16 %v875, %v874
    %v879 = vpack.c.b16 %v877, %v876
    %v883 = vsel %vm160, %v867, 0
    %885 = vmatpush.bf16.msra.mxu0 0
    %886 = vmatpush.bf16.msra.mxu0 0
    %887 = vmatpush.bf16.msra.mxu0 0
    %888 = vmatpush.bf16.msra.mxu0 0
    %889 = vmatpush.bf16.msra.mxu0 0
    %890 = vmatpush.bf16.msra.mxu0 0
    %891 = vmatpush.bf16.msra.mxu0 %v879
    %892 = vmatpush.bf16.msra.mxu0 %v878
    %893 = vmatmul.bf16.gmra.mxu0 %v883
    %v894 = vpop.f32.mrf.mxu0
    %v895 = vadd.f32 %v869, %v894
    %v896 = vpop.f32.mrf.mxu0
    %v897 = vadd.f32 %v869, %v896
    %898 = vdwg.mxu0
    %v899 = vmul.f32 %v895, 0.5
    %v900 = vmul.f32 %v897, 0.5
    %v901 = vmul.f32 %v895, 0.70710677
    %v902 = vmul.f32 %v897, 0.70710677
    %v903 = vmul.f32 %v901, %v901
    %v904 = vmin.f32 16.0, %v903
    %v905 = vmul.f32 %v904, 2.1237322e-06
    %v906 = vadd.f32 %v905, 0.00028619796
    %v907 = vmul.f32 %v904, %v906
    %v908 = vadd.f32 %v907, 0.0036580483
    %v909 = vmul.f32 %v904, %v908
    %v910 = vadd.f32 %v909, 0.05243302
    %v911 = vmul.f32 %v904, %v910
    %v912 = vadd.f32 %v911, 0.18741608
    %v913 = vmul.f32 %v904, %v912
    %v914 = vadd.f32 %v913, 1.1283791
    %v915 = vmul.f32 %v901, %v914
    %v916 = vmul.f32 %v904, 3.8918573e-05
    %v917 = vadd.f32 %v916, 0.001143296
    %v918 = vmul.f32 %v904, %v917
    %v919 = vadd.f32 %v918, 0.014752088
    %v920 = vmul.f32 %v904, %v919
    %v921 = vadd.f32 %v920, 0.112945676
    %v922 = vmul.f32 %v904, %v921
    %v923 = vadd.f32 %v922, 0.4994258
    %v924 = vmul.f32 %v904, %v923
    %v925 = vadd.f32 %v924, 1.0
    %v926 = vrcp.pop %v925
    %v927 = vmul.f32 %v925, %v926
    %v928 = vsub.f32 1.0, %v927
    %v929 = vmul.f32 %v926, %v928
    %v930 = vadd.f32 %v926, %v929
    %vm931 = vweird.f32 %v925
    %vm932 = vweird.f32 %v926
    %vm933 = vmor %vm931, %vm932
    %v934 = vsel %vm933, %v926, %v930
    %v935 = vand.u32 2147483647, %v925
    %vm936 = vcmp.eq.f32.partialorder %v935, 8.507059e+37
    %v937 = vand.u32 %v925, 2147483648
    %v938 = vor.u32 1.1754944e-38, %v937
    %v939 = vsel %vm936, %v938, %v934
    %v940 = vmul.f32 %v915, %v939
    %v941 = vmin.f32 %v940, 1.0
    %v942 = vmax.f32 %v941, -1.0
    %v943 = vmul.f32 %v902, %v902
    %v944 = vmin.f32 16.0, %v943
    %v945 = vmul.f32 %v944, 2.1237322e-06
    %v946 = vadd.f32 %v945, 0.00028619796
    %v947 = vmul.f32 %v944, %v946
    %v948 = vadd.f32 %v947, 0.0036580483
    %v949 = vmul.f32 %v944, %v948
    %v950 = vadd.f32 %v949, 0.05243302
    %v951 = vmul.f32 %v944, %v950
    %v952 = vadd.f32 %v951, 0.18741608
    %v953 = vmul.f32 %v944, %v952
    %v954 = vadd.f32 %v953, 1.1283791
    %v955 = vmul.f32 %v902, %v954
    %v956 = vmul.f32 %v944, 3.8918573e-05
    %v957 = vadd.f32 %v956, 0.001143296
    %v958 = vmul.f32 %v944, %v957
    %v959 = vadd.f32 %v958, 0.014752088
    %v960 = vmul.f32 %v944, %v959
    %v961 = vadd.f32 %v960, 0.112945676
    %v962 = vmul.f32 %v944, %v961
    %v963 = vadd.f32 %v962, 0.4994258
    %v964 = vmul.f32 %v944, %v963
    %v965 = vadd.f32 %v964, 1.0
    %v966 = vrcp.pop %v965
    %v967 = vmul.f32 %v965, %v966
    %v968 = vsub.f32 1.0, %v967
    %v969 = vmul.f32 %v966, %v968
    %v970 = vadd.f32 %v966, %v969
    %vm971 = vweird.f32 %v965
    %vm972 = vweird.f32 %v966
    %vm973 = vmor %vm971, %vm972
    %v974 = vsel %vm973, %v966, %v970
    %v975 = vand.u32 2147483647, %v965
    %vm976 = vcmp.eq.f32.partialorder %v975, 8.507059e+37
    %v977 = vand.u32 %v965, 2147483648
    %v978 = vor.u32 1.1754944e-38, %v977
    %v979 = vsel %vm976, %v978, %v974
    %v980 = vmul.f32 %v955, %v979
    %v981 = vmin.f32 %v980, 1.0
    %v982 = vmax.f32 %v981, -1.0
    %v983 = vadd.f32 %v942, 1.0
    %v984 = vadd.f32 %v982, 1.0
    %v985 = vmul.f32 %v899, %v983
    %v986 = vmul.f32 %v900, %v984
    %v987 = vld [vmem:[%s1 + $0x90] sm:$0xf]
    %v988 = vld [vmem:[%s1 + $0x94] sm:$0xf]
    %v989 = vld [vmem:[%s1 + $0x98] sm:$0xf]
    %v990 = vld [vmem:[%s1 + $0x9c] sm:$0xf]
    %v991 = vld [vmem:[%s1 + $0xa0] sm:$0xf]
    %v992 = vld [vmem:[%s1 + $0xa4] sm:$0xf]
    %v993 = vld [vmem:[%s1 + $0xa8] sm:$0xf]
    %v994 = vld [vmem:[%s1 + $0xac] sm:$0xf]
    %v995 = vpack.c.bf16 %v986, %v985
    %v996 = vld [vmem:[%s2 + $0x17] sm:$0x1]
    %v997 = vperm.slane %v996, 0
    %v1006 = vunpack.c.l.b16 %v987
    %v1007 = vunpack.c.l.b16 %v988
    %v1008 = vunpack.c.l.b16 %v989
    %v1009 = vunpack.c.l.b16 %v990
    %v1010 = vunpack.c.l.b16 %v991
    %v1011 = vunpack.c.l.b16 %v992
    %v1012 = vunpack.c.l.b16 %v993
    %v1013 = vunpack.c.l.b16 %v994
    %v1014 = vpack.c.b16 %v1007, %v1006
    %v1015 = vpack.c.b16 %v1009, %v1008
    %v1016 = vpack.c.b16 %v1011, %v1010
    %v1017 = vpack.c.b16 %v1013, %v1012
    %v1023 = vsel %vm125, %v995, 0
    %1025 = vmatpush.bf16.msra.mxu0 0
    %1026 = vmatpush.bf16.msra.mxu0 0
    %1027 = vmatpush.bf16.msra.mxu0 0
    %1028 = vmatpush.bf16.msra.mxu0 0
    %1029 = vmatpush.bf16.msra.mxu0 %v1017
    %1030 = vmatpush.bf16.msra.mxu0 %v1016
    %1031 = vmatpush.bf16.msra.mxu0 %v1015
    %1032 = vmatpush.bf16.msra.mxu0 %v1014
    %1033 = vmatmul.bf16.gmra.mxu0 %v1023
    %v1034 = vpop.f32.mrf.mxu0
    %v1035 = vadd.f32 %v997, %v1034
    %v1036 = vpop.f32.mrf.mxu0
    %v1037 = vadd.f32 %v997, %v1036
    %1038 = vdwg.mxu0
    %v1039 = vadd.f32 %v1035, %v809
    %v1040 = vadd.f32 %v1037, %v810
    %v1041 = vld [vmem:[%s2 + $0x18] sm:$0x1]
    %v1042 = vld [vmem:[%s2 + $0x19] sm:$0x1]
    %v1043 = vsel %vm160, %v1039, 0.0
    %1044 = vadd.xlane.f32.xlu0 %v1043
    %v1045 = vpop.xlane.xlu0 %1044
    %v1046 = vsel %vm160, %v1040, 0.0
    %1047 = vadd.xlane.f32.xlu0 %v1046
    %v1048 = vpop.xlane.xlu0 %1047
    %v1049 = vmul.f32 %v1045, %v173
    %v1050 = vmul.f32 %v1048, %v173
    %v1051 = vsub.f32 %v1039, %v1049
    %v1052 = vsub.f32 %v1040, %v1050
    %v1053 = vmul.f32 %v1051, %v1051
    %v1054 = vmul.f32 %v1052, %v1052
    %v1055 = vsel %vm160, %v1053, 0.0
    %1056 = vadd.xlane.f32.xlu0 %v1055
    %v1057 = vpop.xlane.xlu0 %1056
    %v1058 = vsel %vm160, %v1054, 0.0
    %1059 = vadd.xlane.f32.xlu0 %v1058
    %v1060 = vpop.xlane.xlu0 %1059
    %v1061 = vmul.f32 %v1057, %v173
    %v1062 = vmul.f32 %v1060, %v173
    %v1063 = vadd.f32 %v1061, 1e-06
    %v1064 = vadd.f32 %v1062, 1e-06
    %v1065 = vrsqrt.pop %v1063
    %v1066 = vmul.f32 %v1065, %v1063
    %v1067 = vmul.f32 %v1066, %v1065
    %v1068 = vmul.f32 0.5, %v1067
    %v1069 = vsub.f32 1.5, %v1068
    %v1070 = vmul.f32 %v1065, %v1069
    %vm1071 = vweird.f32 %v1063
    %vm1072 = vweird.f32 %v1065
    %vm1073 = vmor %vm1071, %vm1072
    %v1074 = vsel %vm1073, %v1065, %v1070
    %v1075 = vrsqrt.pop %v1064
    %v1076 = vmul.f32 %v1075, %v1064
    %v1077 = vmul.f32 %v1076, %v1075
    %v1078 = vmul.f32 0.5, %v1077
    %v1079 = vsub.f32 1.5, %v1078
    %v1080 = vmul.f32 %v1075, %v1079
    %vm1081 = vweird.f32 %v1064
    %vm1082 = vweird.f32 %v1075
    %vm1083 = vmor %vm1081, %vm1082
    %v1084 = vsel %vm1083, %v1075, %v1080
    %v1085 = vmul.f32 %v1051, %v1074
    %v1086 = vmul.f32 %v1052, %v1084
    %v1087 = vperm.slane %v1041, 0
    %v1088 = vmul.f32 %v1085, %v1087
    %v1089 = vmul.f32 %v1086, %v1087
    %v1090 = vperm.slane %v1042, 0
    %v1091 = vadd.f32 %v1088, %v1090
    %v1092 = vadd.f32 %v1089, %v1090
    %v1093 = vld [vmem:[%s1 + $0xb0] sm:$0xf]
    %v1094 = vld [vmem:[%s1 + $0xb4] sm:$0xf]
    %v1095 = vld [vmem:[%s1 + $0xb8] sm:$0xf]
    %v1096 = vld [vmem:[%s1 + $0xbc] sm:$0xf]
    %v1097 = vpack.c.bf16 %v1092, %v1091
    %v1098 = vld [vmem:[%s2 + $0x1a] sm:$0x1]
    %v1099 = vperm.slane %v1098, 0
    %v1104 = vunpack.c.l.b16 %v1093
    %v1105 = vunpack.c.l.b16 %v1094
    %v1106 = vunpack.c.l.b16 %v1095
    %v1107 = vunpack.c.l.b16 %v1096
    %v1108 = vpack.c.b16 %v1105, %v1104
    %v1109 = vpack.c.b16 %v1107, %v1106
    %v1113 = vsel %vm160, %v1097, 0
    %1115 = vmatpush.bf16.msra.mxu0 0
    %1116 = vmatpush.bf16.msra.mxu0 0
    %1117 = vmatpush.bf16.msra.mxu0 0
    %1118 = vmatpush.bf16.msra.mxu0 0
    %1119 = vmatpush.bf16.msra.mxu0 0
    %1120 = vmatpush.bf16.msra.mxu0 0
    %1121 = vmatpush.bf16.msra.mxu0 %v1109
    %1122 = vmatpush.bf16.msra.mxu0 %v1108
    %1123 = vmatmul.bf16.gmra.mxu0 %v1113
    %v1124 = vpop.f32.mrf.mxu0
    %v1125 = vadd.f32 %v1099, %v1124
    %v1126 = vpop.f32.mrf.mxu0
    %v1127 = vadd.f32 %v1099, %v1126
    %1128 = vdwg.mxu0
    %1131 = vrot.lane.b32.xlu0 %v1125, 120
    %v1132 = vpop.permute.xlu0 %1131
    %1133 = vrot.lane.b32.xlu0 %v1127, 120
    %v1134 = vpop.permute.xlu0 %1133
    %1137 = vrot.lane.b32.xlu0 %v1125, 112
    %v1138 = vpop.permute.xlu0 %1137
    %1139 = vrot.lane.b32.xlu0 %v1127, 112
    %v1140 = vpop.permute.xlu0 %1139
    %1143 = vrot.lane.b32.xlu0 %v1125, 104
    %v1144 = vpop.permute.xlu0 %1143
    %1145 = vrot.lane.b32.xlu0 %v1127, 104
    %v1146 = vpop.permute.xlu0 %1145
    %v1149 = vpack.c.bf16 %v1125, %v1125
    %v1150 = vpack.c.bf16 %v1127, %v1127
    %v1151 = vpack.c.bf16 %v1132, %v1132
    %v1152 = vpack.c.bf16 %v1134, %v1134
    %v1153 = vpack.c.bf16 %v1138, %v1138
    %v1154 = vpack.c.bf16 %v1140, %v1140
    %v1155 = vpack.c.bf16 %v1144, %v1144
    %v1156 = vpack.c.bf16 %v1146, %v1146
    %v1158 = vunpack.c.l.b16 %v1149
    %v1159 = vpack.c.b16 %v1158, %v1158
    %1160 = vrot.lane.b32.xlu0 %v1159, 96
    %v1161 = vpop.permute.xlu0 %1160
    %v1163 = vsel %vm288, %v1149, 0
    %v1166 = vsel %vm288, %v1161, 0
    %1168 = vmatpush.bf16.xpose.msra.mxu0 0
    %1169 = vmatpush.bf16.xpose.msra.mxu0 0
    %1170 = vmatpush.bf16.xpose.msra.mxu0 0
    %1171 = vmatpush.bf16.xpose.msra.mxu0 0
    %1172 = vmatpush.bf16.xpose.msra.mxu0 0
    %1173 = vmatpush.bf16.xpose.msra.mxu0 0
    %1174 = vmatpush.bf16.xpose.msra.mxu0 0
    %1175 = vmatpush.bf16.xpose.msra.mxu0 %v1166
    %1176 = vmatmul.bf16.gmra.mxu0 %v1163
    %v1177 = vpop.f32.mrf.mxu0
    %v1178 = vadd.f32 %v282, %v1177
    %v1179 = vpop.f32.mrf.mxu0
    %1180 = vdwg.mxu0
    %v1182 = vunpack.c.l.b16 %v1150
    %v1183 = vpack.c.b16 %v1182, %v1182
    %1184 = vrot.lane.b32.xlu0 %v1183, 96
    %v1185 = vpop.permute.xlu0 %1184
    %v1187 = vsel %vm288, %v1150, 0
    %v1190 = vsel %vm288, %v1185, 0
    %1192 = vmatpush.bf16.xpose.msra.mxu0 0
    %1193 = vmatpush.bf16.xpose.msra.mxu0 0
    %1194 = vmatpush.bf16.xpose.msra.mxu0 0
    %1195 = vmatpush.bf16.xpose.msra.mxu0 0
    %1196 = vmatpush.bf16.xpose.msra.mxu0 0
    %1197 = vmatpush.bf16.xpose.msra.mxu0 0
    %1198 = vmatpush.bf16.xpose.msra.mxu0 0
    %1199 = vmatpush.bf16.xpose.msra.mxu0 %v1190
    %1200 = vmatmul.bf16.gmra.mxu0 %v1187
    %v1201 = vpop.f32.mrf.mxu0
    %v1202 = vadd.f32 %v282, %v1201
    %v1203 = vpop.f32.mrf.mxu0
    %1204 = vdwg.mxu0
    %v1206 = vunpack.c.l.b16 %v1151
    %v1207 = vpack.c.b16 %v1206, %v1206
    %1208 = vrot.lane.b32.xlu0 %v1207, 96
    %v1209 = vpop.permute.xlu0 %1208
    %v1211 = vsel %vm288, %v1151, 0
    %v1214 = vsel %vm288, %v1209, 0
    %1216 = vmatpush.bf16.xpose.msra.mxu0 0
    %1217 = vmatpush.bf16.xpose.msra.mxu0 0
    %1218 = vmatpush.bf16.xpose.msra.mxu0 0
    %1219 = vmatpush.bf16.xpose.msra.mxu0 0
    %1220 = vmatpush.bf16.xpose.msra.mxu0 0
    %1221 = vmatpush.bf16.xpose.msra.mxu0 0
    %1222 = vmatpush.bf16.xpose.msra.mxu0 0
    %1223 = vmatpush.bf16.xpose.msra.mxu0 %v1214
    %1224 = vmatmul.bf16.gmra.mxu0 %v1211
    %v1225 = vpop.f32.mrf.mxu0
    %v1226 = vadd.f32 %v282, %v1225
    %v1227 = vpop.f32.mrf.mxu0
    %1228 = vdwg.mxu0
    %v1230 = vunpack.c.l.b16 %v1152
    %v1231 = vpack.c.b16 %v1230, %v1230
    %1232 = vrot.lane.b32.xlu0 %v1231, 96
    %v1233 = vpop.permute.xlu0 %1232
    %v1235 = vsel %vm288, %v1152, 0
    %v1238 = vsel %vm288, %v1233, 0
    %1240 = vmatpush.bf16.xpose.msra.mxu0 0
    %1241 = vmatpush.bf16.xpose.msra.mxu0 0
    %1242 = vmatpush.bf16.xpose.msra.mxu0 0
    %1243 = vmatpush.bf16.xpose.msra.mxu0 0
    %1244 = vmatpush.bf16.xpose.msra.mxu0 0
    %1245 = vmatpush.bf16.xpose.msra.mxu0 0
    %1246 = vmatpush.bf16.xpose.msra.mxu0 0
    %1247 = vmatpush.bf16.xpose.msra.mxu0 %v1238
    %1248 = vmatmul.bf16.gmra.mxu0 %v1235
    %v1249 = vpop.f32.mrf.mxu0
    %v1250 = vadd.f32 %v282, %v1249
    %v1251 = vpop.f32.mrf.mxu0
    %1252 = vdwg.mxu0
    %v1254 = vunpack.c.l.b16 %v1153
    %v1255 = vpack.c.b16 %v1254, %v1254
    %1256 = vrot.lane.b32.xlu0 %v1255, 96
    %v1257 = vpop.permute.xlu0 %1256
    %v1259 = vsel %vm288, %v1153, 0
    %v1262 = vsel %vm288, %v1257, 0
    %1264 = vmatpush.bf16.xpose.msra.mxu0 0
    %1265 = vmatpush.bf16.xpose.msra.mxu0 0
    %1266 = vmatpush.bf16.xpose.msra.mxu0 0
    %1267 = vmatpush.bf16.xpose.msra.mxu0 0
    %1268 = vmatpush.bf16.xpose.msra.mxu0 0
    %1269 = vmatpush.bf16.xpose.msra.mxu0 0
    %1270 = vmatpush.bf16.xpose.msra.mxu0 0
    %1271 = vmatpush.bf16.xpose.msra.mxu0 %v1262
    %1272 = vmatmul.bf16.gmra.mxu0 %v1259
    %v1273 = vpop.f32.mrf.mxu0
    %v1274 = vadd.f32 %v282, %v1273
    %v1275 = vpop.f32.mrf.mxu0
    %1276 = vdwg.mxu0
    %v1278 = vunpack.c.l.b16 %v1154
    %v1279 = vpack.c.b16 %v1278, %v1278
    %1280 = vrot.lane.b32.xlu0 %v1279, 96
    %v1281 = vpop.permute.xlu0 %1280
    %v1283 = vsel %vm288, %v1154, 0
    %v1286 = vsel %vm288, %v1281, 0
    %1288 = vmatpush.bf16.xpose.msra.mxu0 0
    %1289 = vmatpush.bf16.xpose.msra.mxu0 0
    %1290 = vmatpush.bf16.xpose.msra.mxu0 0
    %1291 = vmatpush.bf16.xpose.msra.mxu0 0
    %1292 = vmatpush.bf16.xpose.msra.mxu0 0
    %1293 = vmatpush.bf16.xpose.msra.mxu0 0
    %1294 = vmatpush.bf16.xpose.msra.mxu0 0
    %1295 = vmatpush.bf16.xpose.msra.mxu0 %v1286
    %1296 = vmatmul.bf16.gmra.mxu0 %v1283
    %v1297 = vpop.f32.mrf.mxu0
    %v1298 = vadd.f32 %v282, %v1297
    %v1299 = vpop.f32.mrf.mxu0
    %1300 = vdwg.mxu0
    %v1302 = vunpack.c.l.b16 %v1155
    %v1303 = vpack.c.b16 %v1302, %v1302
    %1304 = vrot.lane.b32.xlu0 %v1303, 96
    %v1305 = vpop.permute.xlu0 %1304
    %v1307 = vsel %vm288, %v1155, 0
    %v1310 = vsel %vm288, %v1305, 0
    %1312 = vmatpush.bf16.xpose.msra.mxu0 0
    %1313 = vmatpush.bf16.xpose.msra.mxu0 0
    %1314 = vmatpush.bf16.xpose.msra.mxu0 0
    %1315 = vmatpush.bf16.xpose.msra.mxu0 0
    %1316 = vmatpush.bf16.xpose.msra.mxu0 0
    %1317 = vmatpush.bf16.xpose.msra.mxu0 0
    %1318 = vmatpush.bf16.xpose.msra.mxu0 0
    %1319 = vmatpush.bf16.xpose.msra.mxu0 %v1310
    %1320 = vmatmul.bf16.gmra.mxu0 %v1307
    %v1321 = vpop.f32.mrf.mxu0
    %v1322 = vadd.f32 %v282, %v1321
    %v1323 = vpop.f32.mrf.mxu0
    %1324 = vdwg.mxu0
    %v1326 = vunpack.c.l.b16 %v1156
    %v1327 = vpack.c.b16 %v1326, %v1326
    %1328 = vrot.lane.b32.xlu0 %v1327, 96
    %v1329 = vpop.permute.xlu0 %1328
    %v1331 = vsel %vm288, %v1156, 0
    %v1334 = vsel %vm288, %v1329, 0
    %1336 = vmatpush.bf16.xpose.msra.mxu0 0
    %1337 = vmatpush.bf16.xpose.msra.mxu0 0
    %1338 = vmatpush.bf16.xpose.msra.mxu0 0
    %1339 = vmatpush.bf16.xpose.msra.mxu0 0
    %1340 = vmatpush.bf16.xpose.msra.mxu0 0
    %1341 = vmatpush.bf16.xpose.msra.mxu0 0
    %1342 = vmatpush.bf16.xpose.msra.mxu0 0
    %1343 = vmatpush.bf16.xpose.msra.mxu0 %v1334
    %1344 = vmatmul.bf16.gmra.mxu0 %v1331
    %v1345 = vpop.f32.mrf.mxu0
    %v1346 = vadd.f32 %v282, %v1345
    %v1347 = vpop.f32.mrf.mxu0
    %1348 = vdwg.mxu0
    %v1349 = vsel %vm288, %v1178, -inf
    %1350 = vmax.xlane.f32.xlu0 %v1349
    %v1351 = vpop.xlane.xlu0 %1350
    %v1352 = vsel %vm288, %v1202, -inf
    %1353 = vmax.xlane.f32.xlu0 %v1352
    %v1354 = vpop.xlane.xlu0 %1353
    %v1355 = vsel %vm288, %v1226, -inf
    %1356 = vmax.xlane.f32.xlu0 %v1355
    %v1357 = vpop.xlane.xlu0 %1356
    %v1358 = vsel %vm288, %v1250, -inf
    %1359 = vmax.xlane.f32.xlu0 %v1358
    %v1360 = vpop.xlane.xlu0 %1359
    %v1361 = vsel %vm288, %v1274, -inf
    %1362 = vmax.xlane.f32.xlu0 %v1361
    %v1363 = vpop.xlane.xlu0 %1362
    %v1364 = vsel %vm288, %v1298, -inf
    %1365 = vmax.xlane.f32.xlu0 %v1364
    %v1366 = vpop.xlane.xlu0 %1365
    %v1367 = vsel %vm288, %v1322, -inf
    %1368 = vmax.xlane.f32.xlu0 %v1367
    %v1369 = vpop.xlane.xlu0 %1368
    %v1370 = vsel %vm288, %v1346, -inf
    %1371 = vmax.xlane.f32.xlu0 %v1370
    %v1372 = vpop.xlane.xlu0 %1371
    %v1373 = vsub.f32 %v1178, %v1351
    %v1374 = vsub.f32 %v1202, %v1354
    %v1375 = vsub.f32 %v1226, %v1357
    %v1376 = vsub.f32 %v1250, %v1360
    %v1377 = vsub.f32 %v1274, %v1363
    %v1378 = vsub.f32 %v1298, %v1366
    %v1379 = vsub.f32 %v1322, %v1369
    %v1380 = vsub.f32 %v1346, %v1372
    %v1381 = vmul.f32 %v1373, 1.442695
    %v1382 = vpow.pop %v1381
    %v1383 = vmul.f32 %v1374, 1.442695
    %v1384 = vpow.pop %v1383
    %v1385 = vmul.f32 %v1375, 1.442695
    %v1386 = vpow.pop %v1385
    %v1387 = vmul.f32 %v1376, 1.442695
    %v1388 = vpow.pop %v1387
    %v1389 = vmul.f32 %v1377, 1.442695
    %v1390 = vpow.pop %v1389
    %v1391 = vmul.f32 %v1378, 1.442695
    %v1392 = vpow.pop %v1391
    %v1393 = vmul.f32 %v1379, 1.442695
    %v1394 = vpow.pop %v1393
    %v1395 = vmul.f32 %v1380, 1.442695
    %v1396 = vpow.pop %v1395
    %v1397 = vsel %vm288, %v1382, 0.0
    %1398 = vadd.xlane.f32.xlu0 %v1397
    %v1399 = vpop.xlane.xlu0 %1398
    %v1400 = vsel %vm288, %v1384, 0.0
    %1401 = vadd.xlane.f32.xlu0 %v1400
    %v1402 = vpop.xlane.xlu0 %1401
    %v1403 = vsel %vm288, %v1386, 0.0
    %1404 = vadd.xlane.f32.xlu0 %v1403
    %v1405 = vpop.xlane.xlu0 %1404
    %v1406 = vsel %vm288, %v1388, 0.0
    %1407 = vadd.xlane.f32.xlu0 %v1406
    %v1408 = vpop.xlane.xlu0 %1407
    %v1409 = vsel %vm288, %v1390, 0.0
    %1410 = vadd.xlane.f32.xlu0 %v1409
    %v1411 = vpop.xlane.xlu0 %1410
    %v1412 = vsel %vm288, %v1392, 0.0
    %1413 = vadd.xlane.f32.xlu0 %v1412
    %v1414 = vpop.xlane.xlu0 %1413
    %v1415 = vsel %vm288, %v1394, 0.0
    %1416 = vadd.xlane.f32.xlu0 %v1415
    %v1417 = vpop.xlane.xlu0 %1416
    %v1418 = vsel %vm288, %v1396, 0.0
    %1419 = vadd.xlane.f32.xlu0 %v1418
    %v1420 = vpop.xlane.xlu0 %1419
    %v1421 = vrcp.pop %v1399
    %v1422 = vrcp.pop %v1402
    %v1423 = vrcp.pop %v1405
    %v1424 = vrcp.pop %v1408
    %v1425 = vrcp.pop %v1411
    %v1426 = vrcp.pop %v1414
    %v1427 = vrcp.pop %v1417
    %v1428 = vrcp.pop %v1420
    %v1429 = vmul.f32 %v1382, %v1421
    %v1430 = vmul.f32 %v1384, %v1422
    %v1431 = vmul.f32 %v1386, %v1423
    %v1432 = vmul.f32 %v1388, %v1424
    %v1433 = vmul.f32 %v1390, %v1425
    %v1434 = vmul.f32 %v1392, %v1426
    %v1435 = vmul.f32 %v1394, %v1427
    %v1436 = vmul.f32 %v1396, %v1428
    %v1437 = vpack.c.bf16 %v1429, %v1429
    %v1438 = vpack.c.bf16 %v1430, %v1430
    %v1439 = vpack.c.bf16 %v1431, %v1431
    %v1440 = vpack.c.bf16 %v1432, %v1432
    %v1441 = vpack.c.bf16 %v1433, %v1433
    %v1442 = vpack.c.bf16 %v1434, %v1434
    %v1443 = vpack.c.bf16 %v1435, %v1435
    %v1444 = vpack.c.bf16 %v1436, %v1436
    %1445 = vrot.lane.b32.xlu0 %v1159, 64
    %v1446 = vpop.permute.xlu0 %1445
    %v1448 = vsel %vm288, %v1437, 0
    %v1451 = vsel %vm577, %v1446, 0
    %1453 = vmatpush.bf16.msra.mxu0 0
    %1454 = vmatpush.bf16.msra.mxu0 0
    %1455 = vmatpush.bf16.msra.mxu0 0
    %1456 = vmatpush.bf16.msra.mxu0 0
    %1457 = vmatpush.bf16.msra.mxu0 0
    %1458 = vmatpush.bf16.msra.mxu0 0
    %1459 = vmatpush.bf16.msra.mxu0 0
    %1460 = vmatpush.bf16.msra.mxu0 %v1451
    %1461 = vmatmul.bf16.gmra.mxu0 %v1448
    %v1462 = vpop.f32.mrf.mxu0
    %v1463 = vadd.f32 0.0, %v1462
    %v1464 = vpop.f32.mrf.mxu0
    %1465 = vdwg.mxu0
    %1466 = vrot.lane.b32.xlu0 %v1183, 64
    %v1467 = vpop.permute.xlu0 %1466
    %v1469 = vsel %vm288, %v1438, 0
    %v1472 = vsel %vm577, %v1467, 0
    %1474 = vmatpush.bf16.msra.mxu0 0
    %1475 = vmatpush.bf16.msra.mxu0 0
    %1476 = vmatpush.bf16.msra.mxu0 0
    %1477 = vmatpush.bf16.msra.mxu0 0
    %1478 = vmatpush.bf16.msra.mxu0 0
    %1479 = vmatpush.bf16.msra.mxu0 0
    %1480 = vmatpush.bf16.msra.mxu0 0
    %1481 = vmatpush.bf16.msra.mxu0 %v1472
    %1482 = vmatmul.bf16.gmra.mxu0 %v1469
    %v1483 = vpop.f32.mrf.mxu0
    %v1484 = vadd.f32 0.0, %v1483
    %v1485 = vpop.f32.mrf.mxu0
    %1486 = vdwg.mxu0
    %1487 = vrot.lane.b32.xlu0 %v1207, 64
    %v1488 = vpop.permute.xlu0 %1487
    %v1490 = vsel %vm288, %v1439, 0
    %v1493 = vsel %vm577, %v1488, 0
    %1495 = vmatpush.bf16.msra.mxu0 0
    %1496 = vmatpush.bf16.msra.mxu0 0
    %1497 = vmatpush.bf16.msra.mxu0 0
    %1498 = vmatpush.bf16.msra.mxu0 0
    %1499 = vmatpush.bf16.msra.mxu0 0
    %1500 = vmatpush.bf16.msra.mxu0 0
    %1501 = vmatpush.bf16.msra.mxu0 0
    %1502 = vmatpush.bf16.msra.mxu0 %v1493
    %1503 = vmatmul.bf16.gmra.mxu0 %v1490
    %v1504 = vpop.f32.mrf.mxu0
    %v1505 = vadd.f32 0.0, %v1504
    %v1506 = vpop.f32.mrf.mxu0
    %1507 = vdwg.mxu0
    %1508 = vrot.lane.b32.xlu0 %v1231, 64
    %v1509 = vpop.permute.xlu0 %1508
    %v1511 = vsel %vm288, %v1440, 0
    %v1514 = vsel %vm577, %v1509, 0
    %1516 = vmatpush.bf16.msra.mxu0 0
    %1517 = vmatpush.bf16.msra.mxu0 0
    %1518 = vmatpush.bf16.msra.mxu0 0
    %1519 = vmatpush.bf16.msra.mxu0 0
    %1520 = vmatpush.bf16.msra.mxu0 0
    %1521 = vmatpush.bf16.msra.mxu0 0
    %1522 = vmatpush.bf16.msra.mxu0 0
    %1523 = vmatpush.bf16.msra.mxu0 %v1514
    %1524 = vmatmul.bf16.gmra.mxu0 %v1511
    %v1525 = vpop.f32.mrf.mxu0
    %v1526 = vadd.f32 0.0, %v1525
    %v1527 = vpop.f32.mrf.mxu0
    %1528 = vdwg.mxu0
    %1529 = vrot.lane.b32.xlu0 %v1255, 64
    %v1530 = vpop.permute.xlu0 %1529
    %v1532 = vsel %vm288, %v1441, 0
    %v1535 = vsel %vm577, %v1530, 0
    %1537 = vmatpush.bf16.msra.mxu0 0
    %1538 = vmatpush.bf16.msra.mxu0 0
    %1539 = vmatpush.bf16.msra.mxu0 0
    %1540 = vmatpush.bf16.msra.mxu0 0
    %1541 = vmatpush.bf16.msra.mxu0 0
    %1542 = vmatpush.bf16.msra.mxu0 0
    %1543 = vmatpush.bf16.msra.mxu0 0
    %1544 = vmatpush.bf16.msra.mxu0 %v1535
    %1545 = vmatmul.bf16.gmra.mxu0 %v1532
    %v1546 = vpop.f32.mrf.mxu0
    %v1547 = vadd.f32 0.0, %v1546
    %v1548 = vpop.f32.mrf.mxu0
    %1549 = vdwg.mxu0
    %1550 = vrot.lane.b32.xlu0 %v1279, 64
    %v1551 = vpop.permute.xlu0 %1550
    %v1553 = vsel %vm288, %v1442, 0
    %v1556 = vsel %vm577, %v1551, 0
    %1558 = vmatpush.bf16.msra.mxu0 0
    %1559 = vmatpush.bf16.msra.mxu0 0
    %1560 = vmatpush.bf16.msra.mxu0 0
    %1561 = vmatpush.bf16.msra.mxu0 0
    %1562 = vmatpush.bf16.msra.mxu0 0
    %1563 = vmatpush.bf16.msra.mxu0 0
    %1564 = vmatpush.bf16.msra.mxu0 0
    %1565 = vmatpush.bf16.msra.mxu0 %v1556
    %1566 = vmatmul.bf16.gmra.mxu0 %v1553
    %v1567 = vpop.f32.mrf.mxu0
    %v1568 = vadd.f32 0.0, %v1567
    %v1569 = vpop.f32.mrf.mxu0
    %1570 = vdwg.mxu0
    %1571 = vrot.lane.b32.xlu0 %v1303, 64
    %v1572 = vpop.permute.xlu0 %1571
    %v1574 = vsel %vm288, %v1443, 0
    %v1577 = vsel %vm577, %v1572, 0
    %1579 = vmatpush.bf16.msra.mxu0 0
    %1580 = vmatpush.bf16.msra.mxu0 0
    %1581 = vmatpush.bf16.msra.mxu0 0
    %1582 = vmatpush.bf16.msra.mxu0 0
    %1583 = vmatpush.bf16.msra.mxu0 0
    %1584 = vmatpush.bf16.msra.mxu0 0
    %1585 = vmatpush.bf16.msra.mxu0 0
    %1586 = vmatpush.bf16.msra.mxu0 %v1577
    %1587 = vmatmul.bf16.gmra.mxu0 %v1574
    %v1588 = vpop.f32.mrf.mxu0
    %v1589 = vadd.f32 0.0, %v1588
    %v1590 = vpop.f32.mrf.mxu0
    %1591 = vdwg.mxu0
    %1592 = vrot.lane.b32.xlu0 %v1327, 64
    %v1593 = vpop.permute.xlu0 %1592
    %v1595 = vsel %vm288, %v1444, 0
    %v1598 = vsel %vm577, %v1593, 0
    %1600 = vmatpush.bf16.msra.mxu0 0
    %1601 = vmatpush.bf16.msra.mxu0 0
    %1602 = vmatpush.bf16.msra.mxu0 0
    %1603 = vmatpush.bf16.msra.mxu0 0
    %1604 = vmatpush.bf16.msra.mxu0 0
    %1605 = vmatpush.bf16.msra.mxu0 0
    %1606 = vmatpush.bf16.msra.mxu0 0
    %1607 = vmatpush.bf16.msra.mxu0 %v1598
    %1608 = vmatmul.bf16.gmra.mxu0 %v1595
    %v1609 = vpop.f32.mrf.mxu0
    %v1610 = vadd.f32 0.0, %v1609
    %v1611 = vpop.f32.mrf.mxu0
    %1612 = vdwg.mxu0
    %1615 = vrot.lane.b32.xlu0 %v1505, 8
    %v1616 = vpop.permute.xlu0 %1615
    %1617 = vrot.lane.b32.xlu0 %v1526, 8
    %v1618 = vpop.permute.xlu0 %1617
    %1623 = vrot.lane.b32.xlu0 %v1547, 16
    %v1624 = vpop.permute.xlu0 %1623
    %1625 = vrot.lane.b32.xlu0 %v1568, 16
    %v1626 = vpop.permute.xlu0 %1625
    %1631 = vrot.lane.b32.xlu0 %v1589, 24
    %v1632 = vpop.permute.xlu0 %1631
    %1633 = vrot.lane.b32.xlu0 %v1610, 24
    %v1634 = vpop.permute.xlu0 %1633
    %v1637 = vsel %vm288, %v1463, %v1616
    %v1638 = vsel %vm288, %v1484, %v1618
    %v1639 = vsel %vm767, %v1637, %v1624
    %v1640 = vsel %vm767, %v1638, %v1626
    %v1641 = vsel %vm770, %v1639, %v1632
    %v1642 = vsel %vm770, %v1640, %v1634
    %v1643 = vld [vmem:[%s1 + $0xc0] sm:$0xf]
    %v1644 = vld [vmem:[%s1 + $0xc4] sm:$0xf]
    %v1645 = vld [vmem:[%s1 + $0xc8] sm:$0xf]
    %v1646 = vld [vmem:[%s1 + $0xcc] sm:$0xf]
    %v1647 = vpack.c.bf16 %v1642, %v1641
    %v1648 = vld [vmem:[%s2 + $0x1b] sm:$0x1]
    %v1649 = vperm.slane %v1648, 0
    %v1654 = vunpack.c.l.b16 %v1643
    %v1655 = vunpack.c.l.b16 %v1644
    %v1656 = vunpack.c.l.b16 %v1645
    %v1657 = vunpack.c.l.b16 %v1646
    %v1658 = vpack.c.b16 %v1655, %v1654
    %v1659 = vpack.c.b16 %v1657, %v1656
    %v1663 = vsel %vm160, %v1647, 0
    %1665 = vmatpush.bf16.msra.mxu0 0
    %1666 = vmatpush.bf16.msra.mxu0 0
    %1667 = vmatpush.bf16.msra.mxu0 0
    %1668 = vmatpush.bf16.msra.mxu0 0
    %1669 = vmatpush.bf16.msra.mxu0 0
    %1670 = vmatpush.bf16.msra.mxu0 0
    %1671 = vmatpush.bf16.msra.mxu0 %v1659
    %1672 = vmatpush.bf16.msra.mxu0 %v1658
    %1673 = vmatmul.bf16.gmra.mxu0 %v1663
    %v1674 = vpop.f32.mrf.mxu0
    %v1675 = vadd.f32 %v1649, %v1674
    %v1676 = vpop.f32.mrf.mxu0
    %v1677 = vadd.f32 %v1649, %v1676
    %1678 = vdwg.mxu0
    %v1679 = vadd.f32 %v1675, %v1039
    %v1680 = vadd.f32 %v1677, %v1040
    %v1681 = vld [vmem:[%s2 + $0x1c] sm:$0x1]
    %v1682 = vld [vmem:[%s2 + $0x1d] sm:$0x1]
    %v1683 = vsel %vm160, %v1679, 0.0
    %1684 = vadd.xlane.f32.xlu0 %v1683
    %v1685 = vpop.xlane.xlu0 %1684
    %v1686 = vsel %vm160, %v1680, 0.0
    %1687 = vadd.xlane.f32.xlu0 %v1686
    %v1688 = vpop.xlane.xlu0 %1687
    %v1689 = vmul.f32 %v1685, %v173
    %v1690 = vmul.f32 %v1688, %v173
    %v1691 = vsub.f32 %v1679, %v1689
    %v1692 = vsub.f32 %v1680, %v1690
    %v1693 = vmul.f32 %v1691, %v1691
    %v1694 = vmul.f32 %v1692, %v1692
    %v1695 = vsel %vm160, %v1693, 0.0
    %1696 = vadd.xlane.f32.xlu0 %v1695
    %v1697 = vpop.xlane.xlu0 %1696
    %v1698 = vsel %vm160, %v1694, 0.0
    %1699 = vadd.xlane.f32.xlu0 %v1698
    %v1700 = vpop.xlane.xlu0 %1699
    %v1701 = vmul.f32 %v1697, %v173
    %v1702 = vmul.f32 %v1700, %v173
    %v1703 = vadd.f32 %v1701, 1e-06
    %v1704 = vadd.f32 %v1702, 1e-06
    %v1705 = vrsqrt.pop %v1703
    %v1706 = vmul.f32 %v1705, %v1703
    %v1707 = vmul.f32 %v1706, %v1705
    %v1708 = vmul.f32 0.5, %v1707
    %v1709 = vsub.f32 1.5, %v1708
    %v1710 = vmul.f32 %v1705, %v1709
    %vm1711 = vweird.f32 %v1703
    %vm1712 = vweird.f32 %v1705
    %vm1713 = vmor %vm1711, %vm1712
    %v1714 = vsel %vm1713, %v1705, %v1710
    %v1715 = vrsqrt.pop %v1704
    %v1716 = vmul.f32 %v1715, %v1704
    %v1717 = vmul.f32 %v1716, %v1715
    %v1718 = vmul.f32 0.5, %v1717
    %v1719 = vsub.f32 1.5, %v1718
    %v1720 = vmul.f32 %v1715, %v1719
    %vm1721 = vweird.f32 %v1704
    %vm1722 = vweird.f32 %v1715
    %vm1723 = vmor %vm1721, %vm1722
    %v1724 = vsel %vm1723, %v1715, %v1720
    %v1725 = vmul.f32 %v1691, %v1714
    %v1726 = vmul.f32 %v1692, %v1724
    %v1727 = vperm.slane %v1681, 0
    %v1728 = vmul.f32 %v1725, %v1727
    %v1729 = vmul.f32 %v1726, %v1727
    %v1730 = vperm.slane %v1682, 0
    %v1731 = vadd.f32 %v1728, %v1730
    %v1732 = vadd.f32 %v1729, %v1730
    %v1733 = vld [vmem:[%s1 + $0xd0] sm:$0xf]
    %v1734 = vld [vmem:[%s1 + $0xd4] sm:$0xf]
    %v1735 = vld [vmem:[%s1 + $0xd8] sm:$0xf]
    %v1736 = vld [vmem:[%s1 + $0xdc] sm:$0xf]
    %v1737 = vpack.c.bf16 %v1732, %v1731
    %v1738 = vld [vmem:[%s2 + $0x1e] sm:$0x1]
    %v1739 = vperm.slane %v1738, 0
    %v1744 = vunpack.c.l.b16 %v1733
    %v1745 = vunpack.c.l.b16 %v1734
    %v1746 = vunpack.c.l.b16 %v1735
    %v1747 = vunpack.c.l.b16 %v1736
    %v1748 = vpack.c.b16 %v1745, %v1744
    %v1749 = vpack.c.b16 %v1747, %v1746
    %v1753 = vsel %vm160, %v1737, 0
    %1755 = vmatpush.bf16.msra.mxu0 0
    %1756 = vmatpush.bf16.msra.mxu0 0
    %1757 = vmatpush.bf16.msra.mxu0 0
    %1758 = vmatpush.bf16.msra.mxu0 0
    %1759 = vmatpush.bf16.msra.mxu0 0
    %1760 = vmatpush.bf16.msra.mxu0 0
    %1761 = vmatpush.bf16.msra.mxu0 %v1749
    %1762 = vmatpush.bf16.msra.mxu0 %v1748
    %1763 = vmatmul.bf16.gmra.mxu0 %v1753
    %v1764 = vpop.f32.mrf.mxu0
    %v1765 = vadd.f32 %v1739, %v1764
    %v1766 = vpop.f32.mrf.mxu0
    %v1767 = vadd.f32 %v1739, %v1766
    %1768 = vdwg.mxu0
    %v1769 = vmul.f32 %v1765, 0.5
    %v1770 = vmul.f32 %v1767, 0.5
    %v1771 = vmul.f32 %v1765, 0.70710677
    %v1772 = vmul.f32 %v1767, 0.70710677
    %v1773 = vmul.f32 %v1771, %v1771
    %v1774 = vmin.f32 16.0, %v1773
    %v1775 = vmul.f32 %v1774, 2.1237322e-06
    %v1776 = vadd.f32 %v1775, 0.00028619796
    %v1777 = vmul.f32 %v1774, %v1776
    %v1778 = vadd.f32 %v1777, 0.0036580483
    %v1779 = vmul.f32 %v1774, %v1778
    %v1780 = vadd.f32 %v1779, 0.05243302
    %v1781 = vmul.f32 %v1774, %v1780
    %v1782 = vadd.f32 %v1781, 0.18741608
    %v1783 = vmul.f32 %v1774, %v1782
    %v1784 = vadd.f32 %v1783, 1.1283791
    %v1785 = vmul.f32 %v1771, %v1784
    %v1786 = vmul.f32 %v1774, 3.8918573e-05
    %v1787 = vadd.f32 %v1786, 0.001143296
    %v1788 = vmul.f32 %v1774, %v1787
    %v1789 = vadd.f32 %v1788, 0.014752088
    %v1790 = vmul.f32 %v1774, %v1789
    %v1791 = vadd.f32 %v1790, 0.112945676
    %v1792 = vmul.f32 %v1774, %v1791
    %v1793 = vadd.f32 %v1792, 0.4994258
    %v1794 = vmul.f32 %v1774, %v1793
    %v1795 = vadd.f32 %v1794, 1.0
    %v1796 = vrcp.pop %v1795
    %v1797 = vmul.f32 %v1795, %v1796
    %v1798 = vsub.f32 1.0, %v1797
    %v1799 = vmul.f32 %v1796, %v1798
    %v1800 = vadd.f32 %v1796, %v1799
    %vm1801 = vweird.f32 %v1795
    %vm1802 = vweird.f32 %v1796
    %vm1803 = vmor %vm1801, %vm1802
    %v1804 = vsel %vm1803, %v1796, %v1800
    %v1805 = vand.u32 2147483647, %v1795
    %vm1806 = vcmp.eq.f32.partialorder %v1805, 8.507059e+37
    %v1807 = vand.u32 %v1795, 2147483648
    %v1808 = vor.u32 1.1754944e-38, %v1807
    %v1809 = vsel %vm1806, %v1808, %v1804
    %v1810 = vmul.f32 %v1785, %v1809
    %v1811 = vmin.f32 %v1810, 1.0
    %v1812 = vmax.f32 %v1811, -1.0
    %v1813 = vmul.f32 %v1772, %v1772
    %v1814 = vmin.f32 16.0, %v1813
    %v1815 = vmul.f32 %v1814, 2.1237322e-06
    %v1816 = vadd.f32 %v1815, 0.00028619796
    %v1817 = vmul.f32 %v1814, %v1816
    %v1818 = vadd.f32 %v1817, 0.0036580483
    %v1819 = vmul.f32 %v1814, %v1818
    %v1820 = vadd.f32 %v1819, 0.05243302
    %v1821 = vmul.f32 %v1814, %v1820
    %v1822 = vadd.f32 %v1821, 0.18741608
    %v1823 = vmul.f32 %v1814, %v1822
    %v1824 = vadd.f32 %v1823, 1.1283791
    %v1825 = vmul.f32 %v1772, %v1824
    %v1826 = vmul.f32 %v1814, 3.8918573e-05
    %v1827 = vadd.f32 %v1826, 0.001143296
    %v1828 = vmul.f32 %v1814, %v1827
    %v1829 = vadd.f32 %v1828, 0.014752088
    %v1830 = vmul.f32 %v1814, %v1829
    %v1831 = vadd.f32 %v1830, 0.112945676
    %v1832 = vmul.f32 %v1814, %v1831
    %v1833 = vadd.f32 %v1832, 0.4994258
    %v1834 = vmul.f32 %v1814, %v1833
    %v1835 = vadd.f32 %v1834, 1.0
    %v1836 = vrcp.pop %v1835
    %v1837 = vmul.f32 %v1835, %v1836
    %v1838 = vsub.f32 1.0, %v1837
    %v1839 = vmul.f32 %v1836, %v1838
    %v1840 = vadd.f32 %v1836, %v1839
    %vm1841 = vweird.f32 %v1835
    %vm1842 = vweird.f32 %v1836
    %vm1843 = vmor %vm1841, %vm1842
    %v1844 = vsel %vm1843, %v1836, %v1840
    %v1845 = vand.u32 2147483647, %v1835
    %vm1846 = vcmp.eq.f32.partialorder %v1845, 8.507059e+37
    %v1847 = vand.u32 %v1835, 2147483648
    %v1848 = vor.u32 1.1754944e-38, %v1847
    %v1849 = vsel %vm1846, %v1848, %v1844
    %v1850 = vmul.f32 %v1825, %v1849
    %v1851 = vmin.f32 %v1850, 1.0
    %v1852 = vmax.f32 %v1851, -1.0
    %v1853 = vadd.f32 %v1812, 1.0
    %v1854 = vadd.f32 %v1852, 1.0
    %v1855 = vmul.f32 %v1769, %v1853
    %v1856 = vmul.f32 %v1770, %v1854
    %v1857 = vld [vmem:[%s1 + $0xe0] sm:$0xf]
    %v1858 = vld [vmem:[%s1 + $0xe4] sm:$0xf]
    %v1859 = vld [vmem:[%s1 + $0xe8] sm:$0xf]
    %v1860 = vld [vmem:[%s1 + $0xec] sm:$0xf]
    %v1861 = vld [vmem:[%s1 + $0xf0] sm:$0xf]
    %v1862 = vld [vmem:[%s1 + $0xf4] sm:$0xf]
    %v1863 = vld [vmem:[%s1 + $0xf8] sm:$0xf]
    %v1864 = vld [vmem:[%s1 + $0xfc] sm:$0xf]
    %v1865 = vpack.c.bf16 %v1856, %v1855
    %v1866 = vld [vmem:[%s2 + $0x1f] sm:$0x1]
    %v1867 = vperm.slane %v1866, 0
    %v1876 = vunpack.c.l.b16 %v1857
    %v1877 = vunpack.c.l.b16 %v1858
    %v1878 = vunpack.c.l.b16 %v1859
    %v1879 = vunpack.c.l.b16 %v1860
    %v1880 = vunpack.c.l.b16 %v1861
    %v1881 = vunpack.c.l.b16 %v1862
    %v1882 = vunpack.c.l.b16 %v1863
    %v1883 = vunpack.c.l.b16 %v1864
    %v1884 = vpack.c.b16 %v1877, %v1876
    %v1885 = vpack.c.b16 %v1879, %v1878
    %v1886 = vpack.c.b16 %v1881, %v1880
    %v1887 = vpack.c.b16 %v1883, %v1882
    %v1893 = vsel %vm125, %v1865, 0
    %1895 = vmatpush.bf16.msra.mxu0 0
    %1896 = vmatpush.bf16.msra.mxu0 0
    %1897 = vmatpush.bf16.msra.mxu0 0
    %1898 = vmatpush.bf16.msra.mxu0 0
    %1899 = vmatpush.bf16.msra.mxu0 %v1887
    %1900 = vmatpush.bf16.msra.mxu0 %v1886
    %1901 = vmatpush.bf16.msra.mxu0 %v1885
    %1902 = vmatpush.bf16.msra.mxu0 %v1884
    %1903 = vmatmul.bf16.gmra.mxu0 %v1893
    %v1904 = vpop.f32.mrf.mxu0
    %v1905 = vadd.f32 %v1867, %v1904
    %v1906 = vpop.f32.mrf.mxu0
    %v1907 = vadd.f32 %v1867, %v1906
    %1908 = vdwg.mxu0
    %v1909 = vadd.f32 %v1905, %v1679
    %v1910 = vadd.f32 %v1907, %v1680
    %v1912 = vrot.slane %v1910, 7
    %vm1914 = vcmask 1040384
    %v1915 = vsel %vm1914, %v1909, %v1912
    %v1916 = vld [vmem:[%s2 + $0x20] sm:$0x1]
    %v1917 = vld [vmem:[%s2 + $0x21] sm:$0x1]
    %vm1918 = vcmask 254976
    %v1919 = vsel %vm1918, %v1915, 0.0
    %1920 = vadd.xlane.f32.xlu0 %v1919
    %v1921 = vpop.xlane.xlu0 %1920
    %v1922 = vmul.f32 %v1921, %v173
    %v1923 = vsub.f32 %v1915, %v1922
    %v1924 = vmul.f32 %v1923, %v1923
    %v1925 = vsel %vm1918, %v1924, 0.0
    %1926 = vadd.xlane.f32.xlu0 %v1925
    %v1927 = vpop.xlane.xlu0 %1926
    %v1928 = vmul.f32 %v1927, %v173
    %v1929 = vadd.f32 %v1928, 1e-06
    %v1930 = vrsqrt.pop %v1929
    %v1931 = vmul.f32 %v1930, %v1929
    %v1932 = vmul.f32 %v1931, %v1930
    %v1933 = vmul.f32 0.5, %v1932
    %v1934 = vsub.f32 1.5, %v1933
    %v1935 = vmul.f32 %v1930, %v1934
    %vm1936 = vweird.f32 %v1929
    %vm1937 = vweird.f32 %v1930
    %vm1938 = vmor %vm1936, %vm1937
    %v1939 = vsel %vm1938, %v1930, %v1935
    %v1940 = vmul.f32 %v1923, %v1939
    %v1941 = vperm.slane %v1916, 0
    %v1942 = vmul.f32 %v1940, %v1941
    %v1943 = vperm.slane %v1917, 0
    %v1944 = vadd.f32 %v1942, %v1943
    %v1945 = vld [vmem:[%s1 + $0x100] sm:$0xf]
    %v1946 = vld [vmem:[%s1 + $0x104] sm:$0xf]
    %v1947 = vld [vmem:[%s1 + $0x108] sm:$0xf]
    %v1948 = vld [vmem:[%s1 + $0x10c] sm:$0xf]
    %v1949 = vpack.c.bf16 %v1944, %v1944
    %v1954 = vunpack.c.l.b16 %v1945
    %v1955 = vunpack.c.l.b16 %v1946
    %v1956 = vunpack.c.l.b16 %v1947
    %v1957 = vunpack.c.l.b16 %v1948
    %v1958 = vpack.c.b16 %v1955, %v1954
    %v1959 = vpack.c.b16 %v1957, %v1956
    %v1963 = vsel %vm160, %v1949, 0
    %1965 = vmatpush.bf16.msra.mxu0 0
    %1966 = vmatpush.bf16.msra.mxu0 0
    %1967 = vmatpush.bf16.msra.mxu0 0
    %1968 = vmatpush.bf16.msra.mxu0 0
    %1969 = vmatpush.bf16.msra.mxu0 0
    %1970 = vmatpush.bf16.msra.mxu0 0
    %1971 = vmatpush.bf16.msra.mxu0 %v1959
    %1972 = vmatpush.bf16.msra.mxu0 %v1958
    %1973 = vmatmul.bf16.gmra.mxu0 %v1963
    %v1974 = vpop.f32.mrf.mxu0
    %v1975 = vadd.f32 0.0, %v1974
    %v1976 = vpop.f32.mrf.mxu0
    %1977 = vdwg.mxu0
    %vm1978 = vcmask 517120
    %1979 = vst.msk [vmem:[#allocation2] sm:$0x3] %vm1978, %v1975
    // Predicated region
    $region14: #{vit_age_forward.1} parent=1 // pred_check
      _
    $region15: #{vit_age_forward.1} parent=1 // pred_check_branch
      %1981 = sbr.rel (0) target = $region17
    $region16: #{vit_age_forward.1} parent=1 // pred_region
      %1983 = vsyncadd [#allocation3], 0
      %s1985 = sshll.u32 [#allocation2], 4
      %s1986 = int_to_ptr.vmem [resolvable:$true] %s1985
      %s1987 = sshll.u32 %s3, 4
      %s1988 = int_to_ptr.hbm [resolvable:$true] %s1987
      %1990 = dma.vmem_to_hbm [thread:$0]  %s1986, 32, %s1988, [#allocation3]
    $region17: #{vit_age_forward.1} parent=1 // pred_fallthru
      _
    // Predicated region
    $region18: #{vit_age_forward.1} parent=1 // pred_check
      _
    $region19: #{vit_age_forward.1} parent=1 // pred_check_branch
      %1992 = sbr.rel (0) target = $region21
    $region20: #{vit_age_forward.1} parent=1 // pred_region
      %1994 = dma.done [#allocation3], 32
    $region21: #{vit_age_forward.1} parent=1 // pred_fallthru
      _
    %1995 = vsyncpa [#allocation3], 1

</llo_original>
